<compile_context>
chip_gen: v7x
topology: tpu7x:2x2x1
jax: 0.10.0
libtpu: 0.0.40
codegen_flags: <defaults>
</compile_context>

<pallas_src>
import functools
import math

import jax
import jax.numpy as jnp
from jax import lax
from jax.experimental import pallas as pl
from jax.experimental.pallas import tpu as pltpu


def _low_layer_kernel(x_ref, w_ref, b_ref, o_ref, *, matmul_dtype, precision):
    # x_ref : (TM, K)   streamed row tile of the input             (VMEM)
    # w_ref : (K, TN)   pre-transposed/pre-cast weight column tile (VMEM)
    # b_ref : (1, TN)   bias column tile                           (VMEM)
    # o_ref : (TM, TN)  output tile
    x = x_ref[...]
    if matmul_dtype is not None and x.dtype != matmul_dtype:
        x = x.astype(matmul_dtype)  # cheap per-tile cast; weight was cast once in the wrapper
    y = jnp.dot(x, w_ref[...], preferred_element_type=jnp.float32, precision=precision)
    y = y + b_ref[...].astype(jnp.float32)
    o_ref[...] = jnp.maximum(y, 0.0).astype(o_ref.dtype)


def low_layer_forward(
    x,
    weight,
    bias,
    *,
    matmul_dtype=jnp.bfloat16,   # perf default: full-rate bf16 MXU, f32 accumulate
    precision=None,              # only used when matmul_dtype is None (f32 operands)
    out_dtype=None,              # e.g. jnp.bfloat16 if downstream accepts it (halves store BW)
    block_rows=1024,
    block_cols=512,
    vmem_budget_bytes=32 * 1024 * 1024,
):
    """relu(x @ weight.T + bias).  x:(N,K), weight:(O,K), bias:(O,) -> (N,O)."""
    n, in_feats = x.shape
    out_feats, in_feats_w = weight.shape
    assert in_feats == in_feats_w and bias.shape == (out_feats,)
    out_dtype = x.dtype if out_dtype is None else out_dtype

    # --- one-time parameter prep (trace-time, amortized over all row tiles) ---
    w_t = weight.T                       # (K, O): MXU sees a native (M,K)x(K,N) matmul
    if matmul_dtype is not None:
        w_t = w_t.astype(matmul_dtype)   # pre-cast once, not per grid step
        mxu_precision = None
    else:
        mxu_precision = lax.Precision.DEFAULT if precision is None else precision
    bias2d = bias.reshape(1, out_feats)

    # --- output-column tile (no output padding, no wrapper slice) ---
    if out_feats >= 128:
        tn = min(block_cols, out_feats)
        tn = max(128, (tn // 128) * 128)  # lane-aligned; partial last block is masked
    else:
        tn = out_feats                    # exact-width block (== full dim): masked stores
    grid_cols = pl.cdiv(out_feats, tn)

    # --- row tile from a VMEM budget (double-buffered x/out tiles + weight tile) ---
    x_bytes = x.dtype.itemsize
    o_bytes = jnp.dtype(out_dtype).itemsize
    w_bytes = w_t.dtype.itemsize
    sublane = max(8, 32 // x_bytes, 32 // o_bytes)   # 8 for f32, 16 for bf16 tiles
    fixed = 2 * in_feats * tn * w_bytes + 2 * tn * bias2d.dtype.itemsize
    per_row = 2 * in_feats * x_bytes + 2 * tn * o_bytes
    tm_cap = max(sublane, (vmem_budget_bytes - fixed) // max(per_row, 1))
    tm = min(block_rows, n, tm_cap)
    if tm < n:
        tm = max(sublane, (tm // sublane) * sublane)
    grid_rows = pl.cdiv(n, tm)
    # NOTE(v7x): both TensorCores only get work when grid_rows*grid_cols >= 2; at the
    # tiny test shapes a single tile is fine, at real sizes the budget yields many tiles.

    # TODO(synk): for very large in_feats add a K grid axis ("arbitrary", innermost)
    # with an f32 VMEM accumulator + pl.when init/finalize instead of full-K tiles.

    kernel = functools.partial(
        _low_layer_kernel, matmul_dtype=matmul_dtype, precision=mxu_precision)
    cost = pl.CostEstimate(
        flops=2 * n * in_feats * out_feats,
        transcendentals=0,
        bytes_accessed=(n * in_feats * x_bytes
                        + in_feats * out_feats * w_bytes
                        + out_feats * bias2d.dtype.itemsize
                        + n * out_feats * o_bytes),
    )

    return pl.pallas_call(
        kernel,
        out_shape=jax.ShapeDtypeStruct((n, out_feats), out_dtype),
        grid_spec=pltpu.PrefetchScalarGridSpec(
            num_scalar_prefetch=0,
            grid=(grid_rows, grid_cols),
            in_specs=[
                pl.BlockSpec((tm, in_feats), lambda i, j: (i, 0)),  # row tile; resident across j
                pl.BlockSpec((in_feats, tn), lambda i, j: (0, j)),  # weight column tile
                pl.BlockSpec((1, tn), lambda i, j: (0, j)),         # bias column tile
            ],
            out_specs=pl.BlockSpec((tm, tn), lambda i, j: (i, j)),
        ),
        compiler_params=pltpu.CompilerParams(
            dimension_semantics=("parallel", "parallel"),  # independent tiles -> megacore OK
            vmem_limit_bytes=48 * 1024 * 1024,             # headroom under v7x's 64 MiB
        ),
        cost_estimate=cost,
    )(x, w_t, bias2d)


def init_low_layer_params(key, in_feats, out_feats):
    k_w, k_b = jax.random.split(key)
    # nn.init.kaiming_normal_ default: fan_in mode, gain = sqrt(2)
    std = math.sqrt(2.0 / in_feats)
    weight = jax.random.normal(k_w, (out_feats, in_feats), jnp.float32) * std
    # bias keeps nn.Linear's default init (init_params only touches 2-D params)
    bound = 1.0 / math.sqrt(in_feats)
    bias = jax.random.uniform(k_b, (out_feats,), jnp.float32, -bound, bound)
    return weight, bias


def reference_forward(x, weight, bias):
    y = jnp.dot(x, weight.T, precision=lax.Precision.HIGHEST) + bias
    return jnp.maximum(y, 0.0)


if __name__ == "__main__":
    key = jax.random.PRNGKey(0)
    k_p1, k_p2, k_x1, k_x2, k_x3 = jax.random.split(key, 5)

    # Case 1: out_feats < 128 -> exact-width output path (no pad, no slice), 4 row tiles.
    in_feats, out_feats = 32, 64
    w1, b1 = init_low_layer_params(k_p1, in_feats, out_feats)
    x1 = jax.random.normal(k_x1, (512, in_feats), dtype=jnp.float32)
    out1 = jax.block_until_ready(low_layer_forward(
        x1, w1, b1, matmul_dtype=None, precision=lax.Precision.HIGHEST, block_rows=128))
    ref1 = reference_forward(x1, w1, b1)
    assert out1.shape == (512, out_feats)
    assert jnp.allclose(out1, ref1, atol=1e-5, rtol=1e-5)

    # Case 2: out_feats multiple of 128 -> lane-aligned column tiling (grid_cols = 2).
    out_feats2 = 256
    w2, b2 = init_low_layer_params(k_p2, in_feats, out_feats2)
    x2 = jax.random.normal(k_x2, (128, in_feats), dtype=jnp.float32)
    out2 = jax.block_until_ready(low_layer_forward(
        x2, w2, b2, matmul_dtype=None, precision=lax.Precision.HIGHEST, block_cols=128))
    ref2 = reference_forward(x2, w2, b2)
    assert out2.shape == (128, out_feats2)
    assert jnp.allclose(out2, ref2, atol=1e-5, rtol=1e-5)

    # Case 3: tiny single-tile input.
    x3 = jax.random.normal(k_x3, (8, in_feats), dtype=jnp.float32)
    out3 = jax.block_until_ready(low_layer_forward(
        x3, w1, b1, matmul_dtype=None, precision=lax.Precision.HIGHEST))
    ref3 = reference_forward(x3, w1, b1)
    assert out3.shape == (8, out_feats)
    assert jnp.allclose(out3, ref3, atol=1e-5, rtol=1e-5)

    # Case 4: default perf path (bf16 MXU operands, f32 accumulate) -> looser tolerance.
    out4 = jax.block_until_ready(low_layer_forward(x1, w1, b1))
    assert out4.shape == (512, out_feats)
    assert jnp.allclose(out4, ref1, atol=5e-2, rtol=5e-2)

    print("KERNEL_OK")
</pallas_src>

<mosaic_0001>
module attributes {stable_mosaic.version = 11 : i64} {
  func.func @_low_layer_kernel(%arg0: i32, %arg1: i32, %arg2: memref<128x32xf32, #tpu.memory_space<vmem>>, %arg3: memref<32x64xf32, #tpu.memory_space<vmem>>, %arg4: memref<1x64xf32, #tpu.memory_space<vmem>>, %arg5: memref<128x64xf32, #tpu.memory_space<vmem>>) attributes {dimension_semantics = [#tpu.dimension_semantics<parallel>, #tpu.dimension_semantics<parallel>], iteration_bounds = array<i64: 4, 1>, scalar_prefetch = 0 : i64, scratch_operands = 0 : i64, tpu.core_type = #tpu.core_type<tc>, window_params = [{transform_indices = @transform_0, window_bounds = array<i64: 128, 32>}, {transform_indices = @transform_1, window_bounds = array<i64: 32, 64>}, {transform_indices = @transform_2, window_bounds = array<i64: 1, 64>}, {transform_indices = @transform_3, window_bounds = array<i64: 128, 64>}]} {
    %c0 = arith.constant 0 : index
    %c0_0 = arith.constant 0 : index
    %0 = vector.load %arg2[%c0, %c0_0] : memref<128x32xf32, #tpu.memory_space<vmem>>, vector<128x32xf32>
    %c0_1 = arith.constant 0 : index
    %c0_2 = arith.constant 0 : index
    %1 = vector.load %arg3[%c0_1, %c0_2] : memref<32x64xf32, #tpu.memory_space<vmem>>, vector<32x64xf32>
    %cst = arith.constant dense<0.000000e+00> : vector<128x64xf32>
    %2 = tpu.matmul %0, %1, %cst {dimension_numbers = #tpu.dot_dimension_numbers<[1], [0], [0], [1], [0, 0, 1, 1], [], []>, precision = #tpu.contract_precision<fp32>} : vector<128x32xf32>, vector<32x64xf32>, vector<128x64xf32> -> vector<128x64xf32>
    %c0_3 = arith.constant 0 : index
    %c0_4 = arith.constant 0 : index
    %3 = vector.load %arg4[%c0_3, %c0_4] : memref<1x64xf32, #tpu.memory_space<vmem>>, vector<1x64xf32>
    %4 = vector.broadcast %3 : vector<1x64xf32> to vector<128x64xf32>
    %5 = arith.addf %2, %4 : vector<128x64xf32>
    %cst_5 = arith.constant 0.000000e+00 : f32
    %6 = vector.broadcast %cst_5 : f32 to vector<128x64xf32>
    %7 = arith.maximumf %5, %6 : vector<128x64xf32>
    %c0_6 = arith.constant 0 : index
    %c0_7 = arith.constant 0 : index
    %8 = vector.load %arg5[%c0_6, %c0_7] : memref<128x64xf32, #tpu.memory_space<vmem>>, vector<128x64xf32>
    tpu.vector_store %arg5[%c0_6, %c0_7], %7 {strides = array<i32>} : memref<128x64xf32, #tpu.memory_space<vmem>>, vector<128x64xf32>,
    return
  }
  func.func @transform_0(%arg0: i32, %arg1: i32) -> (i32, i32) {
    %c0_i32 = arith.constant 0 : i32
    %c0_i32_0 = arith.constant 0 : i32
    return %arg0, %c0_i32 : i32, i32
  }
  func.func @transform_1(%arg0: i32, %arg1: i32) -> (i32, i32) {
    %c0_i32 = arith.constant 0 : i32
    %c0_i32_0 = arith.constant 0 : i32
    return %c0_i32, %arg1 : i32, i32
  }
  func.func @transform_2(%arg0: i32, %arg1: i32) -> (i32, i32) {
    %c0_i32 = arith.constant 0 : i32
    %c0_i32_0 = arith.constant 0 : i32
    return %c0_i32, %arg1 : i32, i32
  }
  func.func @transform_3(%arg0: i32, %arg1: i32) -> (i32, i32) {
    %c0_i32 = arith.constant 0 : i32
    return %arg0, %arg1 : i32, i32
  }
}

</mosaic_0001>

<llo_original>
// kernel: tpu_custom_call.1
$region0: #{tpu_custom_call.1}
  #allocation0 [shape = 'u32[]', space=smem, size = 0x4, offset = 0x4, fixed_abs, tag = 'smem constant byte address 0x4 - core index']
  #allocation1 [shape = 'u32[144,128]{1,0:T(1,128)}', space=vmem, size = 0x12000, scoped, tag = 'internal scratch']
  %s0 = inlined_call_operand.vmem [shape: f32[512,32], index: 0, kind: input, shape index: {}]
  %s1 = inlined_call_operand.vmem [shape: f32[32,64], index: 1, kind: input, shape index: {}]
  %s2 = inlined_call_operand.vmem [shape: f32[1,64], index: 2, kind: input, shape index: {}]
  %s3 = inlined_call_operand.vmem [shape: f32[512,64], index: 3, kind: output, shape index: {}]
  %s4 = sld [smem:[#allocation0]]
  $region45: #{tpu_custom_call.1} parent=0
    _
  %s6 = ssub.s32 1, %s4
  %s7 = scalar_select 0, %s6, %s4
  loop: start=0, step=1, limit=6
  $region2: #{tpu_custom_call.1} parent=0 // loop_pre_header
    _
  $region3: #{tpu_custom_call.1} parent=0 // loop_header
    %s9 = sphi 0, %s13
    %p10 = scmp.ge.s32.totalorder %s9, 6
    %s16 = sphi 0, %s28
    %s17 = sphi 0, %s24
    %s18 = sphi 0, %s16
    %s19 = sphi 0, %s17
    %s20 = sphi 0, %s18
    %s21 = sphi 0, %s19
    %s31 = sphi 0, %s33
    %s34 = sphi 0, %s31
    %s35 = sphi 0, %s34
    %s51 = sphi 0, %s35
    %s57 = sphi 0, %s59
    %s60 = sphi 0, %s57
    %s61 = sphi 0, %s60
    %s77 = sphi 0, %s61
    %s83 = sphi 0, %s85
    %s86 = sphi 0, %s83
    %s87 = sphi 0, %s86
    %s103 = sphi 0, %s87
    %s111 = sphi 0, %s113
    %s114 = sphi 0, %s111
    %s115 = sphi 0, %s114
    %s131 = sphi 0, %s115
  $region4: #{tpu_custom_call.1} parent=0 // loop_header_branch
    %12 = sbr.rel (%p10) target = $region8
  $region5: #{tpu_custom_call.1} parent=0 // loop_body
    %s14 = ssub.s32 %s9, 1
    %s15 = ssub.s32 %s9, 2
    %s22 = sadd.s32 1, %s17
    %p23 = scmp.ge.s32.totalorder %s22, 1
    %s24 = scalar_select %p23, 0, %s22
    %s25 = sadd.s32 1, %s16
    %s26 = scalar_select %p23, %s25, %s16
    %p27 = scmp.ge.s32.totalorder %s26, 4
    %s28 = scalar_select %p27, 0, %s26
    %s29 = ssub.s32 %s16, %s28
    %p30 = scmp.eq.s32.totalorder %s29, 0
    %s32 = sadd.s32 %s31, 1
    %s33 = scalar_select %p30, %s31, %s32
    %p36 = pneg %p30
    %p37 = scmp.eq.s32.totalorder %s9, 3
    %p38 = por %p36, %p37
    %p39 = scmp.ne.s32.totalorder %s31, %s34
    %p40 = scmp.eq.s32.totalorder %s9, 0
    %p41 = por %p39, %p40
    %p42 = scmp.ne.s32.totalorder %s31, %s34
    %p43 = scmp.eq.s32.totalorder %s14, 3
    %p44 = por %p42, %p43
    %p45 = scmp.ne.s32.totalorder %s34, %s35
    %p46 = scmp.eq.s32.totalorder %s14, 0
    %p47 = por %p45, %p46
    %p48 = scmp.ne.s32.totalorder %s34, %s35
    %p49 = scmp.eq.s32.totalorder %s15, 3
    %p50 = por %p48, %p49
    %p52 = scmp.ne.s32.totalorder %s35, %s51
    %p53 = scmp.eq.s32.totalorder %s15, 0
    %p54 = por %p52, %p53
    %s55 = ssub.s32 %s17, %s24
    %p56 = scmp.eq.s32.totalorder %s55, 0
    %s58 = sadd.s32 %s57, 1
    %s59 = scalar_select %p56, %s57, %s58
    %p62 = pneg %p56
    %p63 = scmp.eq.s32.totalorder %s9, 3
    %p64 = por %p62, %p63
    %p65 = scmp.ne.s32.totalorder %s57, %s60
    %p66 = scmp.eq.s32.totalorder %s9, 0
    %p67 = por %p65, %p66
    %p68 = scmp.ne.s32.totalorder %s57, %s60
    %p69 = scmp.eq.s32.totalorder %s14, 3
    %p70 = por %p68, %p69
    %p71 = scmp.ne.s32.totalorder %s60, %s61
    %p72 = scmp.eq.s32.totalorder %s14, 0
    %p73 = por %p71, %p72
    %p74 = scmp.ne.s32.totalorder %s60, %s61
    %p75 = scmp.eq.s32.totalorder %s15, 3
    %p76 = por %p74, %p75
    %p78 = scmp.ne.s32.totalorder %s61, %s77
    %p79 = scmp.eq.s32.totalorder %s15, 0
    %p80 = por %p78, %p79
    %s81 = ssub.s32 %s17, %s24
    %p82 = scmp.eq.s32.totalorder %s81, 0
    %s84 = sadd.s32 %s83, 1
    %s85 = scalar_select %p82, %s83, %s84
    %p88 = pneg %p82
    %p89 = scmp.eq.s32.totalorder %s9, 3
    %p90 = por %p88, %p89
    %p91 = scmp.ne.s32.totalorder %s83, %s86
    %p92 = scmp.eq.s32.totalorder %s9, 0
    %p93 = por %p91, %p92
    %p94 = scmp.ne.s32.totalorder %s83, %s86
    %p95 = scmp.eq.s32.totalorder %s14, 3
    %p96 = por %p94, %p95
    %p97 = scmp.ne.s32.totalorder %s86, %s87
    %p98 = scmp.eq.s32.totalorder %s14, 0
    %p99 = por %p97, %p98
    %p100 = scmp.ne.s32.totalorder %s86, %s87
    %p101 = scmp.eq.s32.totalorder %s15, 3
    %p102 = por %p100, %p101
    %p104 = scmp.ne.s32.totalorder %s87, %s103
    %p105 = scmp.eq.s32.totalorder %s15, 0
    %p106 = por %p104, %p105
    %s107 = ssub.s32 %s16, %s28
    %s108 = ssub.s32 %s17, %s24
    %s109 = sor.u32 %s107, %s108
    %p110 = scmp.eq.s32.totalorder %s109, 0
    %s112 = sadd.s32 %s111, 1
    %s113 = scalar_select %p110, %s111, %s112
    %p116 = pneg %p110
    %p117 = scmp.eq.s32.totalorder %s9, 3
    %p118 = por %p116, %p117
    %p119 = scmp.ne.s32.totalorder %s111, %s114
    %p120 = scmp.eq.s32.totalorder %s9, 0
    %p121 = por %p119, %p120
    %p122 = scmp.ne.s32.totalorder %s111, %s114
    %p123 = scmp.eq.s32.totalorder %s14, 3
    %p124 = por %p122, %p123
    %p125 = scmp.ne.s32.totalorder %s114, %s115
    %p126 = scmp.eq.s32.totalorder %s14, 0
    %p127 = por %p125, %p126
    %p128 = scmp.ne.s32.totalorder %s114, %s115
    %p129 = scmp.eq.s32.totalorder %s15, 3
    %p130 = por %p128, %p129
    %p132 = scmp.ne.s32.totalorder %s115, %s131
    %p133 = scmp.eq.s32.totalorder %s15, 0
    %p134 = por %p132, %p133
    %p135 = scmp.le.s32.totalorder 1, %s9
    %p136 = scmp.lt.s32.totalorder %s9, 5
    %p137 = pnand %p135, %p136
    %p138 = pneg %p137
    // Predicated region
    $region9: #{tpu_custom_call.1} parent=5 // pred_check
      _
    $region10: #{tpu_custom_call.1} parent=5 // pred_check_branch
      %140 = sbr.rel (%p137) target = $region12
    $region11: #{tpu_custom_call.1} parent=5 // pred_region
      %s141 = ssub.s32 %s9, 1
      // Predicated region
      $region13: #{tpu_custom_call.1} parent=11 // pred_check
        %p142 = pneg %p73
      $region14: #{tpu_custom_call.1} parent=11 // pred_check_branch
        %144 = sbr.rel (%p142) target = $region16
      $region15: #{tpu_custom_call.1} parent=11 // pred_region
        %p145 = scmp.lt.s32.totalorder %s19, 0
        %s146 = scalar_select %p145, %s19, 0
        %s147 = smul.addr %s146, 8
        %s148 = scalar_lea.vmem %s1, %s147
      $region16: #{tpu_custom_call.1} parent=11 // pred_fallthru
        _
      // Predicated region
      $region17: #{tpu_custom_call.1} parent=11 // pred_check
        %p149 = pneg %p99
      $region18: #{tpu_custom_call.1} parent=11 // pred_check_branch
        %151 = sbr.rel (%p149) target = $region20
      $region19: #{tpu_custom_call.1} parent=11 // pred_region
        %p152 = scmp.lt.s32.totalorder %s19, 0
        %s153 = scalar_select %p152, %s19, 0
        %s154 = scalar_lea.vmem %s2, %s153
      $region20: #{tpu_custom_call.1} parent=11 // pred_fallthru
        _
    $region12: #{tpu_custom_call.1} parent=5 // pred_fallthru
      _
    %p155 = scmp.lt.s32.totalorder %s9, 4
    // Predicated region
    $region21: #{tpu_custom_call.1} parent=5 // pred_check
      %p156 = pneg %p155
    $region22: #{tpu_custom_call.1} parent=5 // pred_check_branch
      %158 = sbr.rel (%p156) target = $region24
    $region23: #{tpu_custom_call.1} parent=5 // pred_region
      // Predicated region
      $region25: #{tpu_custom_call.1} parent=23 // pred_check
        %p159 = pneg %p41
      $region26: #{tpu_custom_call.1} parent=23 // pred_check_branch
        %161 = sbr.rel (%p159) target = $region28
      $region27: #{tpu_custom_call.1} parent=23 // pred_region
        %s162 = smul.u32 16, %s16
        %p163 = scmp.lt.s32.totalorder %s162, 63
        %s164 = scalar_select %p163, %s162, 63
        %s165 = smul.addr %s164, 8
        %s166 = scalar_lea.vmem %s0, %s165
        %s167 = smul.u32 16, %s16
      $region28: #{tpu_custom_call.1} parent=23 // pred_fallthru
        _
    $region24: #{tpu_custom_call.1} parent=5 // pred_fallthru
      _
    %p168 = scmp.le.s32.totalorder 1, %s9
    %p169 = scmp.lt.s32.totalorder %s9, 5
    %p170 = pnand %p168, %p169
    %p171 = pneg %p170
    // Predicated region
    $region29: #{tpu_custom_call.1} parent=5 // pred_check
      _
    $region30: #{tpu_custom_call.1} parent=5 // pred_check_branch
      %173 = sbr.rel (%p170) target = $region32
    $region31: #{tpu_custom_call.1} parent=5 // pred_region
      %s174 = ssub.s32 %s9, 1
      %s175 = smul.u32 16, %s18
      %p176 = scmp.lt.s32.totalorder %s175, 63
      %s177 = scalar_select %p176, %s175, 63
      %s178 = smul.addr %s177, 8
      %s179 = scalar_lea.vmem %s0, %s178
      %p180 = pneg %p47
      %p181 = pneg %p44
      %p182 = scmp.lt.s32.totalorder %s19, 0
      %s183 = scalar_select %p182, %s19, 0
      %s184 = smul.addr %s183, 8
      %s185 = scalar_lea.vmem %s1, %s184
      %p186 = pneg %p73
      %p187 = pneg %p70
      %p188 = scmp.lt.s32.totalorder %s19, 0
      %s189 = scalar_select %p188, %s19, 0
      %s190 = scalar_lea.vmem %s2, %s189
      %p191 = pneg %p99
      %p192 = pneg %p96
      %p193 = pneg %p127
      %p194 = pneg %p124
      %s195 = smul.u32 16, %s18
      %p196 = scmp.lt.s32.totalorder %s195, 63
      %s197 = scalar_select %p196, %s195, 63
      %p198 = scmp.lt.s32.totalorder %s19, 0
      %s199 = scalar_select %p198, %s19, 0
      %s200 = sadd.s32 %s199, %s197
      %s201 = smul.addr %s200, 8
      %s202 = scalar_lea.vmem %s3, %s201
      %s203 = smul.u32 16, %s18
      %p204 = scmp.lt.s32.totalorder %s203, 63
      %s205 = scalar_select %p204, %s203, 63
      %s206 = smul.addr %s205, 8
      %s207 = scalar_lea.vmem %s0, %s206
      %s208 = smul.u32 16, %s18
      %p209 = scmp.lt.s32.totalorder %s19, 0
      %s210 = scalar_select %p209, %s19, 0
      %s211 = smul.addr %s210, 8
      %s212 = scalar_lea.vmem %s1, %s211
      %p213 = scmp.lt.s32.totalorder %s19, 0
      %s214 = scalar_select %p213, %s19, 0
      %s215 = scalar_lea.vmem %s2, %s214
      %s216 = smul.u32 16, %s18
      %p217 = scmp.lt.s32.totalorder %s216, 63
      %s218 = scalar_select %p217, %s216, 63
      %p219 = scmp.lt.s32.totalorder %s19, 0
      %s220 = scalar_select %p219, %s19, 0
      %s221 = sadd.s32 %s220, %s218
      %s222 = smul.addr %s221, 8
      %s223 = scalar_lea.vmem %s3, %s222
      %s224 = smul.u32 16, %s18
      %v225 = vld [vmem:[%s207] sm:$0xff]
      %v226 = vld [vmem:[%s207 + $0x8] sm:$0xff]
      %v227 = vld [vmem:[%s207 + $0x10] sm:$0xff]
      %v228 = vld [vmem:[%s207 + $0x18] sm:$0xff]
      %v229 = vld [vmem:[%s207 + $0x20] sm:$0xff]
      %v230 = vld [vmem:[%s207 + $0x28] sm:$0xff]
      %v231 = vld [vmem:[%s207 + $0x30] sm:$0xff]
      %v232 = vld [vmem:[%s207 + $0x38] sm:$0xff]
      %v233 = vld [vmem:[%s207 + $0x40] sm:$0xff]
      %v234 = vld [vmem:[%s207 + $0x48] sm:$0xff]
      %v235 = vld [vmem:[%s207 + $0x50] sm:$0xff]
      %v236 = vld [vmem:[%s207 + $0x58] sm:$0xff]
      %v237 = vld [vmem:[%s207 + $0x60] sm:$0xff]
      %v238 = vld [vmem:[%s207 + $0x68] sm:$0xff]
      %v239 = vld [vmem:[%s207 + $0x70] sm:$0xff]
      %v240 = vld [vmem:[%s207 + $0x78] sm:$0xff]
      %v241 = vld [vmem:[%s212] sm:$0xff]
      %v242 = vld [vmem:[%s212 + $0x8] sm:$0xff]
      %v243 = vld [vmem:[%s212 + $0x10] sm:$0xff]
      %v244 = vld [vmem:[%s212 + $0x18] sm:$0xff]
      %v245 = vld [vmem:[%s215] sm:$0x1]
      %v247 = vlaneseq
      %v248 = vshrl.u32 %v247, 7
      %v249 = vsub.s32 0, %v248
      %v250 = vrot.slane %v245, %v249
      %vm252 = vcmask 261120
      %v254 = vsel %vm252, %v225, 0
      %v257 = vsel %vm252, %v226, 0
      %v260 = vsel %vm252, %v227, 0
      %v263 = vsel %vm252, %v228, 0
      %v266 = vsel %vm252, %v229, 0
      %v269 = vsel %vm252, %v230, 0
      %v272 = vsel %vm252, %v231, 0
      %v275 = vsel %vm252, %v232, 0
      %v278 = vsel %vm252, %v233, 0
      %v281 = vsel %vm252, %v234, 0
      %v284 = vsel %vm252, %v235, 0
      %v287 = vsel %vm252, %v236, 0
      %v290 = vsel %vm252, %v237, 0
      %v293 = vsel %vm252, %v238, 0
      %v296 = vsel %vm252, %v239, 0
      %v299 = vsel %vm252, %v240, 0
      %301 = vmatprep.subr.mxu0 0.0
      %v302 = vand.u32 %v241, 4294901760
      %303 = vmatpush1.msra.mxu0 %v302
      %304 = vmatprep.subr.mxu0 0.0
      %v305 = vand.u32 %v242, 4294901760
      %306 = vmatpush1.msra.mxu0 %v305
      %307 = vmatprep.subr.mxu0 0.0
      %v308 = vand.u32 %v243, 4294901760
      %309 = vmatpush1.msra.mxu0 %v308
      %310 = vmatprep.subr.mxu0 0.0
      %v311 = vand.u32 %v244, 4294901760
      %312 = vmatpush1.msra.mxu0 %v311
      %313 = vmatprep.subr.mxu0 0.0
      %314 = vmatpush1.msra.mxu0 0.0
      %315 = vmatprep.subr.mxu0 0.0
      %316 = vmatpush1.msra.mxu0 0.0
      %317 = vmatprep.subr.mxu0 0.0
      %318 = vmatpush1.msra.mxu0 0.0
      %319 = vmatprep.subr.mxu0 0.0
      %320 = vmatpush1.msra.mxu0 0.0
      %321 = vmatprep.subr.mxu0 0.0
      %322 = vmatpush1.msra.mxu0 0.0
      %323 = vmatprep.subr.mxu0 0.0
      %324 = vmatpush1.msra.mxu0 0.0
      %325 = vmatprep.subr.mxu0 0.0
      %326 = vmatpush1.msra.mxu0 0.0
      %327 = vmatprep.subr.mxu0 0.0
      %328 = vmatpush1.msra.mxu0 0.0
      %329 = vmatprep.subr.mxu0 0.0
      %330 = vmatpush1.msra.mxu0 0.0
      %331 = vmatprep.subr.mxu0 0.0
      %332 = vmatpush1.msra.mxu0 0.0
      %333 = vmatprep.subr.mxu0 0.0
      %334 = vmatpush1.msra.mxu0 0.0
      %335 = vmatprep.subr.mxu0 0.0
      %336 = vmatpush1.msra.mxu0 0.0
      %337 = vmatprep.subr.mxu0 0.0
      %338 = vmatpush1.msra.mxu0 0.0
      %339 = vmatprep.subr.mxu0 0.0
      %340 = vmatpush1.msra.mxu0 0.0
      %341 = vmatprep.subr.mxu0 0.0
      %342 = vmatpush1.msra.mxu0 0.0
      %343 = vmatprep.subr.mxu0 0.0
      %344 = vmatpush1.msra.mxu0 0.0
      %345 = vmatprep.subr.mxu0 0.0
      %346 = vmatpush1.msra.mxu0 0.0
      %347 = vmatprep.subr.mxu0 0.0
      %348 = vmatpush1.msra.mxu0 0.0
      %349 = vmatprep.subr.mxu0 0.0
      %350 = vmatpush1.msra.mxu0 0.0
      %351 = vmatprep.subr.mxu0 0.0
      %352 = vmatpush1.msra.mxu0 0.0
      %353 = vmatprep.subr.mxu0 0.0
      %354 = vmatpush1.msra.mxu0 0.0
      %355 = vmatprep.subr.mxu0 0.0
      %356 = vmatpush1.msra.mxu0 0.0
      %357 = vmatprep.subr.mxu0 0.0
      %358 = vmatpush1.msra.mxu0 0.0
      %359 = vmatprep.subr.mxu0 0.0
      %360 = vmatpush1.msra.mxu0 0.0
      %361 = vmatprep.subr.mxu0 0.0
      %362 = vmatpush1.msra.mxu0 0.0
      %363 = vmatprep.subr.mxu0 0.0
      %364 = vmatpush1.msra.mxu0 0.0
      %365 = vmatprep.subr.mxu0 0.0
      %366 = vmatpush1.msra.mxu0 0.0
      %367 = vmatprep.subr.mxu0 0.0
      %368 = vmatpush1.msra.mxu0 0.0
      %369 = vmatprep.mubr.f32.mxu0 0.0
      %v370 = vand.u32 %v254, 4294901760
      %v371 = vsub.f32 %v254, %v370
      %v372 = vand.u32 %v371, 4294901760
      %v373 = vsub.f32 %v371, %v372
      %v374 = vand.u32 %v373, 4294901760
      %375 = vmatmul.mubr.f32.gmra.mrb[0].mxu0 %v374
      %v376 = vpop.f32.mrb[0].mxu0
      %v377 = vadd.f32 %v250, %v376
      %v378 = vpop.f32.mrb[0].mxu0
      %379 = vmatprep.mubr.f32.mxu0 0.0
      %v380 = vand.u32 %v257, 4294901760
      %v381 = vsub.f32 %v257, %v380
      %v382 = vand.u32 %v381, 4294901760
      %v383 = vsub.f32 %v381, %v382
      %v384 = vand.u32 %v383, 4294901760
      %385 = vmatmul.mubr.f32.gmra.mrb[0].mxu0 %v384
      %v386 = vpop.f32.mrb[0].mxu0
      %v387 = vadd.f32 %v250, %v386
      %v388 = vpop.f32.mrb[0].mxu0
      %389 = vmatprep.mubr.f32.mxu0 0.0
      %v390 = vand.u32 %v260, 4294901760
      %v391 = vsub.f32 %v260, %v390
      %v392 = vand.u32 %v391, 4294901760
      %v393 = vsub.f32 %v391, %v392
      %v394 = vand.u32 %v393, 4294901760
      %395 = vmatmul.mubr.f32.gmra.mrb[0].mxu0 %v394
      %v396 = vpop.f32.mrb[0].mxu0
      %v397 = vadd.f32 %v250, %v396
      %v398 = vpop.f32.mrb[0].mxu0
      %399 = vmatprep.mubr.f32.mxu0 0.0
      %v400 = vand.u32 %v263, 4294901760
      %v401 = vsub.f32 %v263, %v400
      %v402 = vand.u32 %v401, 4294901760
      %v403 = vsub.f32 %v401, %v402
      %v404 = vand.u32 %v403, 4294901760
      %405 = vmatmul.mubr.f32.gmra.mrb[0].mxu0 %v404
      %v406 = vpop.f32.mrb[0].mxu0
      %v407 = vadd.f32 %v250, %v406
      %v408 = vpop.f32.mrb[0].mxu0
      %409 = vmatprep.mubr.f32.mxu0 0.0
      %v410 = vand.u32 %v266, 4294901760
      %v411 = vsub.f32 %v266, %v410
      %v412 = vand.u32 %v411, 4294901760
      %v413 = vsub.f32 %v411, %v412
      %v414 = vand.u32 %v413, 4294901760
      %415 = vmatmul.mubr.f32.gmra.mrb[0].mxu0 %v414
      %v416 = vpop.f32.mrb[0].mxu0
      %v417 = vadd.f32 %v250, %v416
      %v418 = vpop.f32.mrb[0].mxu0
      %419 = vmatprep.mubr.f32.mxu0 0.0
      %v420 = vand.u32 %v269, 4294901760
      %v421 = vsub.f32 %v269, %v420
      %v422 = vand.u32 %v421, 4294901760
      %v423 = vsub.f32 %v421, %v422
      %v424 = vand.u32 %v423, 4294901760
      %425 = vmatmul.mubr.f32.gmra.mrb[0].mxu0 %v424
      %v426 = vpop.f32.mrb[0].mxu0
      %v427 = vadd.f32 %v250, %v426
      %v428 = vpop.f32.mrb[0].mxu0
      %429 = vmatprep.mubr.f32.mxu0 0.0
      %v430 = vand.u32 %v272, 4294901760
      %v431 = vsub.f32 %v272, %v430
      %v432 = vand.u32 %v431, 4294901760
      %v433 = vsub.f32 %v431, %v432
      %v434 = vand.u32 %v433, 4294901760
      %435 = vmatmul.mubr.f32.gmra.mrb[0].mxu0 %v434
      %v436 = vpop.f32.mrb[0].mxu0
      %v437 = vadd.f32 %v250, %v436
      %v438 = vpop.f32.mrb[0].mxu0
      %439 = vmatprep.mubr.f32.mxu0 0.0
      %v440 = vand.u32 %v275, 4294901760
      %v441 = vsub.f32 %v275, %v440
      %v442 = vand.u32 %v441, 4294901760
      %v443 = vsub.f32 %v441, %v442
      %v444 = vand.u32 %v443, 4294901760
      %445 = vmatmul.mubr.f32.gmra.mrb[0].mxu0 %v444
      %v446 = vpop.f32.mrb[0].mxu0
      %v447 = vadd.f32 %v250, %v446
      %v448 = vpop.f32.mrb[0].mxu0
      %449 = vmatprep.mubr.f32.mxu0 0.0
      %v450 = vand.u32 %v278, 4294901760
      %v451 = vsub.f32 %v278, %v450
      %v452 = vand.u32 %v451, 4294901760
      %v453 = vsub.f32 %v451, %v452
      %v454 = vand.u32 %v453, 4294901760
      %455 = vmatmul.mubr.f32.gmra.mrb[0].mxu0 %v454
      %v456 = vpop.f32.mrb[0].mxu0
      %v457 = vadd.f32 %v250, %v456
      %v458 = vpop.f32.mrb[0].mxu0
      %459 = vmatprep.mubr.f32.mxu0 0.0
      %v460 = vand.u32 %v281, 4294901760
      %v461 = vsub.f32 %v281, %v460
      %v462 = vand.u32 %v461, 4294901760
      %v463 = vsub.f32 %v461, %v462
      %v464 = vand.u32 %v463, 4294901760
      %465 = vmatmul.mubr.f32.gmra.mrb[0].mxu0 %v464
      %v466 = vpop.f32.mrb[0].mxu0
      %v467 = vadd.f32 %v250, %v466
      %v468 = vpop.f32.mrb[0].mxu0
      %469 = vmatprep.mubr.f32.mxu0 0.0
      %v470 = vand.u32 %v284, 4294901760
      %v471 = vsub.f32 %v284, %v470
      %v472 = vand.u32 %v471, 4294901760
      %v473 = vsub.f32 %v471, %v472
      %v474 = vand.u32 %v473, 4294901760
      %475 = vmatmul.mubr.f32.gmra.mrb[0].mxu0 %v474
      %v476 = vpop.f32.mrb[0].mxu0
      %v477 = vadd.f32 %v250, %v476
      %v478 = vpop.f32.mrb[0].mxu0
      %479 = vmatprep.mubr.f32.mxu0 0.0
      %v480 = vand.u32 %v287, 4294901760
      %v481 = vsub.f32 %v287, %v480
      %v482 = vand.u32 %v481, 4294901760
      %v483 = vsub.f32 %v481, %v482
      %v484 = vand.u32 %v483, 4294901760
      %485 = vmatmul.mubr.f32.gmra.mrb[0].mxu0 %v484
      %v486 = vpop.f32.mrb[0].mxu0
      %v487 = vadd.f32 %v250, %v486
      %v488 = vpop.f32.mrb[0].mxu0
      %489 = vmatprep.mubr.f32.mxu0 0.0
      %v490 = vand.u32 %v290, 4294901760
      %v491 = vsub.f32 %v290, %v490
      %v492 = vand.u32 %v491, 4294901760
      %v493 = vsub.f32 %v491, %v492
      %v494 = vand.u32 %v493, 4294901760
      %495 = vmatmul.mubr.f32.gmra.mrb[0].mxu0 %v494
      %v496 = vpop.f32.mrb[0].mxu0
      %v497 = vadd.f32 %v250, %v496
      %v498 = vpop.f32.mrb[0].mxu0
      %499 = vmatprep.mubr.f32.mxu0 0.0
      %v500 = vand.u32 %v293, 4294901760
      %v501 = vsub.f32 %v293, %v500
      %v502 = vand.u32 %v501, 4294901760
      %v503 = vsub.f32 %v501, %v502
      %v504 = vand.u32 %v503, 4294901760
      %505 = vmatmul.mubr.f32.gmra.mrb[0].mxu0 %v504
      %v506 = vpop.f32.mrb[0].mxu0
      %v507 = vadd.f32 %v250, %v506
      %v508 = vpop.f32.mrb[0].mxu0
      %509 = vmatprep.mubr.f32.mxu0 0.0
      %v510 = vand.u32 %v296, 4294901760
      %v511 = vsub.f32 %v296, %v510
      %v512 = vand.u32 %v511, 4294901760
      %v513 = vsub.f32 %v511, %v512
      %v514 = vand.u32 %v513, 4294901760
      %515 = vmatmul.mubr.f32.gmra.mrb[0].mxu0 %v514
      %v516 = vpop.f32.mrb[0].mxu0
      %v517 = vadd.f32 %v250, %v516
      %v518 = vpop.f32.mrb[0].mxu0
      %519 = vmatprep.mubr.f32.mxu0 0.0
      %v520 = vand.u32 %v299, 4294901760
      %v521 = vsub.f32 %v299, %v520
      %v522 = vand.u32 %v521, 4294901760
      %v523 = vsub.f32 %v521, %v522
      %v524 = vand.u32 %v523, 4294901760
      %525 = vmatmul.mubr.f32.gmra.mrb[0].mxu0 %v524
      %v526 = vpop.f32.mrb[0].mxu0
      %v527 = vadd.f32 %v250, %v526
      %v528 = vpop.f32.mrb[0].mxu0
      %529 = vdwg.mxu0
      %530 = vmatprep.subr.mxu0 0.0
      %v531 = vand.u32 %v241, 4294901760
      %v532 = vsub.f32 %v241, %v531
      %v533 = vand.u32 %v532, 4294901760
      %v534 = vsub.f32 %v532, %v533
      %v535 = vand.u32 %v534, 4294901760
      %536 = vmatpush1.msra.mxu0 %v535
      %537 = vmatprep.subr.mxu0 0.0
      %v538 = vand.u32 %v242, 4294901760
      %v539 = vsub.f32 %v242, %v538
      %v540 = vand.u32 %v539, 4294901760
      %v541 = vsub.f32 %v539, %v540
      %v542 = vand.u32 %v541, 4294901760
      %543 = vmatpush1.msra.mxu0 %v542
      %544 = vmatprep.subr.mxu0 0.0
      %v545 = vand.u32 %v243, 4294901760
      %v546 = vsub.f32 %v243, %v545
      %v547 = vand.u32 %v546, 4294901760
      %v548 = vsub.f32 %v546, %v547
      %v549 = vand.u32 %v548, 4294901760
      %550 = vmatpush1.msra.mxu0 %v549
      %551 = vmatprep.subr.mxu0 0.0
      %v552 = vand.u32 %v244, 4294901760
      %v553 = vsub.f32 %v244, %v552
      %v554 = vand.u32 %v553, 4294901760
      %v555 = vsub.f32 %v553, %v554
      %v556 = vand.u32 %v555, 4294901760
      %557 = vmatpush1.msra.mxu0 %v556
      %558 = vmatprep.subr.mxu0 0.0
      %559 = vmatpush1.msra.mxu0 0.0
      %560 = vmatprep.subr.mxu0 0.0
      %561 = vmatpush1.msra.mxu0 0.0
      %562 = vmatprep.subr.mxu0 0.0
      %563 = vmatpush1.msra.mxu0 0.0
      %564 = vmatprep.subr.mxu0 0.0
      %565 = vmatpush1.msra.mxu0 0.0
      %566 = vmatprep.subr.mxu0 0.0
      %567 = vmatpush1.msra.mxu0 0.0
      %568 = vmatprep.subr.mxu0 0.0
      %569 = vmatpush1.msra.mxu0 0.0
      %570 = vmatprep.subr.mxu0 0.0
      %571 = vmatpush1.msra.mxu0 0.0
      %572 = vmatprep.subr.mxu0 0.0
      %573 = vmatpush1.msra.mxu0 0.0
      %574 = vmatprep.subr.mxu0 0.0
      %575 = vmatpush1.msra.mxu0 0.0
      %576 = vmatprep.subr.mxu0 0.0
      %577 = vmatpush1.msra.mxu0 0.0
      %578 = vmatprep.subr.mxu0 0.0
      %579 = vmatpush1.msra.mxu0 0.0
      %580 = vmatprep.subr.mxu0 0.0
      %581 = vmatpush1.msra.mxu0 0.0
      %582 = vmatprep.subr.mxu0 0.0
      %583 = vmatpush1.msra.mxu0 0.0
      %584 = vmatprep.subr.mxu0 0.0
      %585 = vmatpush1.msra.mxu0 0.0
      %586 = vmatprep.subr.mxu0 0.0
      %587 = vmatpush1.msra.mxu0 0.0
      %588 = vmatprep.subr.mxu0 0.0
      %589 = vmatpush1.msra.mxu0 0.0
      %590 = vmatprep.subr.mxu0 0.0
      %591 = vmatpush1.msra.mxu0 0.0
      %592 = vmatprep.subr.mxu0 0.0
      %593 = vmatpush1.msra.mxu0 0.0
      %594 = vmatprep.subr.mxu0 0.0
      %595 = vmatpush1.msra.mxu0 0.0
      %596 = vmatprep.subr.mxu0 0.0
      %597 = vmatpush1.msra.mxu0 0.0
      %598 = vmatprep.subr.mxu0 0.0
      %599 = vmatpush1.msra.mxu0 0.0
      %600 = vmatprep.subr.mxu0 0.0
      %601 = vmatpush1.msra.mxu0 0.0
      %602 = vmatprep.subr.mxu0 0.0
      %603 = vmatpush1.msra.mxu0 0.0
      %604 = vmatprep.subr.mxu0 0.0
      %605 = vmatpush1.msra.mxu0 0.0
      %606 = vmatprep.subr.mxu0 0.0
      %607 = vmatpush1.msra.mxu0 0.0
      %608 = vmatprep.subr.mxu0 0.0
      %609 = vmatpush1.msra.mxu0 0.0
      %610 = vmatprep.subr.mxu0 0.0
      %611 = vmatpush1.msra.mxu0 0.0
      %612 = vmatprep.subr.mxu0 0.0
      %613 = vmatpush1.msra.mxu0 0.0
      %614 = vmatprep.mubr.f32.mxu0 0.0
      %v615 = vand.u32 %v254, 4294901760
      %616 = vmatmul.mubr.f32.gmra.mrb[0].mxu0 %v615
      %v617 = vpop.f32.mrb[0].mxu0
      %v618 = vadd.f32 %v377, %v617
      %v619 = vpop.f32.mrb[0].mxu0
      %620 = vmatprep.mubr.f32.mxu0 0.0
      %v621 = vand.u32 %v257, 4294901760
      %622 = vmatmul.mubr.f32.gmra.mrb[0].mxu0 %v621
      %v623 = vpop.f32.mrb[0].mxu0
      %v624 = vadd.f32 %v387, %v623
      %v625 = vpop.f32.mrb[0].mxu0
      %626 = vmatprep.mubr.f32.mxu0 0.0
      %v627 = vand.u32 %v260, 4294901760
      %628 = vmatmul.mubr.f32.gmra.mrb[0].mxu0 %v627
      %v629 = vpop.f32.mrb[0].mxu0
      %v630 = vadd.f32 %v397, %v629
      %v631 = vpop.f32.mrb[0].mxu0
      %632 = vmatprep.mubr.f32.mxu0 0.0
      %v633 = vand.u32 %v263, 4294901760
      %634 = vmatmul.mubr.f32.gmra.mrb[0].mxu0 %v633
      %v635 = vpop.f32.mrb[0].mxu0
      %v636 = vadd.f32 %v407, %v635
      %v637 = vpop.f32.mrb[0].mxu0
      %638 = vmatprep.mubr.f32.mxu0 0.0
      %v639 = vand.u32 %v266, 4294901760
      %640 = vmatmul.mubr.f32.gmra.mrb[0].mxu0 %v639
      %v641 = vpop.f32.mrb[0].mxu0
      %v642 = vadd.f32 %v417, %v641
      %v643 = vpop.f32.mrb[0].mxu0
      %644 = vmatprep.mubr.f32.mxu0 0.0
      %v645 = vand.u32 %v269, 4294901760
      %646 = vmatmul.mubr.f32.gmra.mrb[0].mxu0 %v645
      %v647 = vpop.f32.mrb[0].mxu0
      %v648 = vadd.f32 %v427, %v647
      %v649 = vpop.f32.mrb[0].mxu0
      %650 = vmatprep.mubr.f32.mxu0 0.0
      %v651 = vand.u32 %v272, 4294901760
      %652 = vmatmul.mubr.f32.gmra.mrb[0].mxu0 %v651
      %v653 = vpop.f32.mrb[0].mxu0
      %v654 = vadd.f32 %v437, %v653
      %v655 = vpop.f32.mrb[0].mxu0
      %656 = vmatprep.mubr.f32.mxu0 0.0
      %v657 = vand.u32 %v275, 4294901760
      %658 = vmatmul.mubr.f32.gmra.mrb[0].mxu0 %v657
      %v659 = vpop.f32.mrb[0].mxu0
      %v660 = vadd.f32 %v447, %v659
      %v661 = vpop.f32.mrb[0].mxu0
      %662 = vmatprep.mubr.f32.mxu0 0.0
      %v663 = vand.u32 %v278, 4294901760
      %664 = vmatmul.mubr.f32.gmra.mrb[0].mxu0 %v663
      %v665 = vpop.f32.mrb[0].mxu0
      %v666 = vadd.f32 %v457, %v665
      %v667 = vpop.f32.mrb[0].mxu0
      %668 = vmatprep.mubr.f32.mxu0 0.0
      %v669 = vand.u32 %v281, 4294901760
      %670 = vmatmul.mubr.f32.gmra.mrb[0].mxu0 %v669
      %v671 = vpop.f32.mrb[0].mxu0
      %v672 = vadd.f32 %v467, %v671
      %v673 = vpop.f32.mrb[0].mxu0
      %674 = vmatprep.mubr.f32.mxu0 0.0
      %v675 = vand.u32 %v284, 4294901760
      %676 = vmatmul.mubr.f32.gmra.mrb[0].mxu0 %v675
      %v677 = vpop.f32.mrb[0].mxu0
      %v678 = vadd.f32 %v477, %v677
      %v679 = vpop.f32.mrb[0].mxu0
      %680 = vmatprep.mubr.f32.mxu0 0.0
      %v681 = vand.u32 %v287, 4294901760
      %682 = vmatmul.mubr.f32.gmra.mrb[0].mxu0 %v681
      %v683 = vpop.f32.mrb[0].mxu0
      %v684 = vadd.f32 %v487, %v683
      %v685 = vpop.f32.mrb[0].mxu0
      %686 = vmatprep.mubr.f32.mxu0 0.0
      %v687 = vand.u32 %v290, 4294901760
      %688 = vmatmul.mubr.f32.gmra.mrb[0].mxu0 %v687
      %v689 = vpop.f32.mrb[0].mxu0
      %v690 = vadd.f32 %v497, %v689
      %v691 = vpop.f32.mrb[0].mxu0
      %692 = vmatprep.mubr.f32.mxu0 0.0
      %v693 = vand.u32 %v293, 4294901760
      %694 = vmatmul.mubr.f32.gmra.mrb[0].mxu0 %v693
      %v695 = vpop.f32.mrb[0].mxu0
      %v696 = vadd.f32 %v507, %v695
      %v697 = vpop.f32.mrb[0].mxu0
      %698 = vmatprep.mubr.f32.mxu0 0.0
      %v699 = vand.u32 %v296, 4294901760
      %700 = vmatmul.mubr.f32.gmra.mrb[0].mxu0 %v699
      %v701 = vpop.f32.mrb[0].mxu0
      %v702 = vadd.f32 %v517, %v701
      %v703 = vpop.f32.mrb[0].mxu0
      %704 = vmatprep.mubr.f32.mxu0 0.0
      %v705 = vand.u32 %v299, 4294901760
      %706 = vmatmul.mubr.f32.gmra.mrb[0].mxu0 %v705
      %v707 = vpop.f32.mrb[0].mxu0
      %v708 = vadd.f32 %v527, %v707
      %v709 = vpop.f32.mrb[0].mxu0
      %710 = vdwg.mxu0
      %711 = vmatprep.subr.mxu0 0.0
      %v712 = vand.u32 %v241, 4294901760
      %v713 = vsub.f32 %v241, %v712
      %714 = vmatpush1.msra.mxu0 %v713
      %715 = vmatprep.subr.mxu0 0.0
      %v716 = vand.u32 %v242, 4294901760
      %v717 = vsub.f32 %v242, %v716
      %718 = vmatpush1.msra.mxu0 %v717
      %719 = vmatprep.subr.mxu0 0.0
      %v720 = vand.u32 %v243, 4294901760
      %v721 = vsub.f32 %v243, %v720
      %722 = vmatpush1.msra.mxu0 %v721
      %723 = vmatprep.subr.mxu0 0.0
      %v724 = vand.u32 %v244, 4294901760
      %v725 = vsub.f32 %v244, %v724
      %726 = vmatpush1.msra.mxu0 %v725
      %727 = vmatprep.subr.mxu0 0.0
      %728 = vmatpush1.msra.mxu0 0.0
      %729 = vmatprep.subr.mxu0 0.0
      %730 = vmatpush1.msra.mxu0 0.0
      %731 = vmatprep.subr.mxu0 0.0
      %732 = vmatpush1.msra.mxu0 0.0
      %733 = vmatprep.subr.mxu0 0.0
      %734 = vmatpush1.msra.mxu0 0.0
      %735 = vmatprep.subr.mxu0 0.0
      %736 = vmatpush1.msra.mxu0 0.0
      %737 = vmatprep.subr.mxu0 0.0
      %738 = vmatpush1.msra.mxu0 0.0
      %739 = vmatprep.subr.mxu0 0.0
      %740 = vmatpush1.msra.mxu0 0.0
      %741 = vmatprep.subr.mxu0 0.0
      %742 = vmatpush1.msra.mxu0 0.0
      %743 = vmatprep.subr.mxu0 0.0
      %744 = vmatpush1.msra.mxu0 0.0
      %745 = vmatprep.subr.mxu0 0.0
      %746 = vmatpush1.msra.mxu0 0.0
      %747 = vmatprep.subr.mxu0 0.0
      %748 = vmatpush1.msra.mxu0 0.0
      %749 = vmatprep.subr.mxu0 0.0
      %750 = vmatpush1.msra.mxu0 0.0
      %751 = vmatprep.subr.mxu0 0.0
      %752 = vmatpush1.msra.mxu0 0.0
      %753 = vmatprep.subr.mxu0 0.0
      %754 = vmatpush1.msra.mxu0 0.0
      %755 = vmatprep.subr.mxu0 0.0
      %756 = vmatpush1.msra.mxu0 0.0
      %757 = vmatprep.subr.mxu0 0.0
      %758 = vmatpush1.msra.mxu0 0.0
      %759 = vmatprep.subr.mxu0 0.0
      %760 = vmatpush1.msra.mxu0 0.0
      %761 = vmatprep.subr.mxu0 0.0
      %762 = vmatpush1.msra.mxu0 0.0
      %763 = vmatprep.subr.mxu0 0.0
      %764 = vmatpush1.msra.mxu0 0.0
      %765 = vmatprep.subr.mxu0 0.0
      %766 = vmatpush1.msra.mxu0 0.0
      %767 = vmatprep.subr.mxu0 0.0
      %768 = vmatpush1.msra.mxu0 0.0
      %769 = vmatprep.subr.mxu0 0.0
      %770 = vmatpush1.msra.mxu0 0.0
      %771 = vmatprep.subr.mxu0 0.0
      %772 = vmatpush1.msra.mxu0 0.0
      %773 = vmatprep.subr.mxu0 0.0
      %774 = vmatpush1.msra.mxu0 0.0
      %775 = vmatprep.subr.mxu0 0.0
      %776 = vmatpush1.msra.mxu0 0.0
      %777 = vmatprep.subr.mxu0 0.0
      %778 = vmatpush1.msra.mxu0 0.0
      %779 = vmatprep.subr.mxu0 0.0
      %780 = vmatpush1.msra.mxu0 0.0
      %781 = vmatprep.subr.mxu0 0.0
      %782 = vmatpush1.msra.mxu0 0.0
      %783 = vmatprep.mubr.f32.mxu0 0.0
      %v784 = vand.u32 %v254, 4294901760
      %v785 = vsub.f32 %v254, %v784
      %786 = vmatmul.mubr.f32.gmra.mrb[0].mxu0 %v785
      %v787 = vpop.f32.mrb[0].mxu0
      %v788 = vadd.f32 %v618, %v787
      %v789 = vpop.f32.mrb[0].mxu0
      %790 = vmatprep.mubr.f32.mxu0 0.0
      %v791 = vand.u32 %v257, 4294901760
      %v792 = vsub.f32 %v257, %v791
      %793 = vmatmul.mubr.f32.gmra.mrb[0].mxu0 %v792
      %v794 = vpop.f32.mrb[0].mxu0
      %v795 = vadd.f32 %v624, %v794
      %v796 = vpop.f32.mrb[0].mxu0
      %797 = vmatprep.mubr.f32.mxu0 0.0
      %v798 = vand.u32 %v260, 4294901760
      %v799 = vsub.f32 %v260, %v798
      %800 = vmatmul.mubr.f32.gmra.mrb[0].mxu0 %v799
      %v801 = vpop.f32.mrb[0].mxu0
      %v802 = vadd.f32 %v630, %v801
      %v803 = vpop.f32.mrb[0].mxu0
      %804 = vmatprep.mubr.f32.mxu0 0.0
      %v805 = vand.u32 %v263, 4294901760
      %v806 = vsub.f32 %v263, %v805
      %807 = vmatmul.mubr.f32.gmra.mrb[0].mxu0 %v806
      %v808 = vpop.f32.mrb[0].mxu0
      %v809 = vadd.f32 %v636, %v808
      %v810 = vpop.f32.mrb[0].mxu0
      %811 = vmatprep.mubr.f32.mxu0 0.0
      %v812 = vand.u32 %v266, 4294901760
      %v813 = vsub.f32 %v266, %v812
      %814 = vmatmul.mubr.f32.gmra.mrb[0].mxu0 %v813
      %v815 = vpop.f32.mrb[0].mxu0
      %v816 = vadd.f32 %v642, %v815
      %v817 = vpop.f32.mrb[0].mxu0
      %818 = vmatprep.mubr.f32.mxu0 0.0
      %v819 = vand.u32 %v269, 4294901760
      %v820 = vsub.f32 %v269, %v819
      %821 = vmatmul.mubr.f32.gmra.mrb[0].mxu0 %v820
      %v822 = vpop.f32.mrb[0].mxu0
      %v823 = vadd.f32 %v648, %v822
      %v824 = vpop.f32.mrb[0].mxu0
      %825 = vmatprep.mubr.f32.mxu0 0.0
      %v826 = vand.u32 %v272, 4294901760
      %v827 = vsub.f32 %v272, %v826
      %828 = vmatmul.mubr.f32.gmra.mrb[0].mxu0 %v827
      %v829 = vpop.f32.mrb[0].mxu0
      %v830 = vadd.f32 %v654, %v829
      %v831 = vpop.f32.mrb[0].mxu0
      %832 = vmatprep.mubr.f32.mxu0 0.0
      %v833 = vand.u32 %v275, 4294901760
      %v834 = vsub.f32 %v275, %v833
      %835 = vmatmul.mubr.f32.gmra.mrb[0].mxu0 %v834
      %v836 = vpop.f32.mrb[0].mxu0
      %v837 = vadd.f32 %v660, %v836
      %v838 = vpop.f32.mrb[0].mxu0
      %839 = vmatprep.mubr.f32.mxu0 0.0
      %v840 = vand.u32 %v278, 4294901760
      %v841 = vsub.f32 %v278, %v840
      %842 = vmatmul.mubr.f32.gmra.mrb[0].mxu0 %v841
      %v843 = vpop.f32.mrb[0].mxu0
      %v844 = vadd.f32 %v666, %v843
      %v845 = vpop.f32.mrb[0].mxu0
      %846 = vmatprep.mubr.f32.mxu0 0.0
      %v847 = vand.u32 %v281, 4294901760
      %v848 = vsub.f32 %v281, %v847
      %849 = vmatmul.mubr.f32.gmra.mrb[0].mxu0 %v848
      %v850 = vpop.f32.mrb[0].mxu0
      %v851 = vadd.f32 %v672, %v850
      %v852 = vpop.f32.mrb[0].mxu0
      %853 = vmatprep.mubr.f32.mxu0 0.0
      %v854 = vand.u32 %v284, 4294901760
      %v855 = vsub.f32 %v284, %v854
      %856 = vmatmul.mubr.f32.gmra.mrb[0].mxu0 %v855
      %v857 = vpop.f32.mrb[0].mxu0
      %v858 = vadd.f32 %v678, %v857
      %v859 = vpop.f32.mrb[0].mxu0
      %860 = vmatprep.mubr.f32.mxu0 0.0
      %v861 = vand.u32 %v287, 4294901760
      %v862 = vsub.f32 %v287, %v861
      %863 = vmatmul.mubr.f32.gmra.mrb[0].mxu0 %v862
      %v864 = vpop.f32.mrb[0].mxu0
      %v865 = vadd.f32 %v684, %v864
      %v866 = vpop.f32.mrb[0].mxu0
      %867 = vmatprep.mubr.f32.mxu0 0.0
      %v868 = vand.u32 %v290, 4294901760
      %v869 = vsub.f32 %v290, %v868
      %870 = vmatmul.mubr.f32.gmra.mrb[0].mxu0 %v869
      %v871 = vpop.f32.mrb[0].mxu0
      %v872 = vadd.f32 %v690, %v871
      %v873 = vpop.f32.mrb[0].mxu0
      %874 = vmatprep.mubr.f32.mxu0 0.0
      %v875 = vand.u32 %v293, 4294901760
      %v876 = vsub.f32 %v293, %v875
      %877 = vmatmul.mubr.f32.gmra.mrb[0].mxu0 %v876
      %v878 = vpop.f32.mrb[0].mxu0
      %v879 = vadd.f32 %v696, %v878
      %v880 = vpop.f32.mrb[0].mxu0
      %881 = vmatprep.mubr.f32.mxu0 0.0
      %v882 = vand.u32 %v296, 4294901760
      %v883 = vsub.f32 %v296, %v882
      %884 = vmatmul.mubr.f32.gmra.mrb[0].mxu0 %v883
      %v885 = vpop.f32.mrb[0].mxu0
      %v886 = vadd.f32 %v702, %v885
      %v887 = vpop.f32.mrb[0].mxu0
      %888 = vmatprep.mubr.f32.mxu0 0.0
      %v889 = vand.u32 %v299, 4294901760
      %v890 = vsub.f32 %v299, %v889
      %891 = vmatmul.mubr.f32.gmra.mrb[0].mxu0 %v890
      %v892 = vpop.f32.mrb[0].mxu0
      %v893 = vadd.f32 %v708, %v892
      %v894 = vpop.f32.mrb[0].mxu0
      %895 = vdwg.mxu0
      %896 = vmatprep.subr.mxu0 0.0
      %v897 = vand.u32 %v241, 4294901760
      %898 = vmatpush1.msra.mxu0 %v897
      %899 = vmatprep.subr.mxu0 0.0
      %v900 = vand.u32 %v242, 4294901760
      %901 = vmatpush1.msra.mxu0 %v900
      %902 = vmatprep.subr.mxu0 0.0
      %v903 = vand.u32 %v243, 4294901760
      %904 = vmatpush1.msra.mxu0 %v903
      %905 = vmatprep.subr.mxu0 0.0
      %v906 = vand.u32 %v244, 4294901760
      %907 = vmatpush1.msra.mxu0 %v906
      %908 = vmatprep.subr.mxu0 0.0
      %909 = vmatpush1.msra.mxu0 0.0
      %910 = vmatprep.subr.mxu0 0.0
      %911 = vmatpush1.msra.mxu0 0.0
      %912 = vmatprep.subr.mxu0 0.0
      %913 = vmatpush1.msra.mxu0 0.0
      %914 = vmatprep.subr.mxu0 0.0
      %915 = vmatpush1.msra.mxu0 0.0
      %916 = vmatprep.subr.mxu0 0.0
      %917 = vmatpush1.msra.mxu0 0.0
      %918 = vmatprep.subr.mxu0 0.0
      %919 = vmatpush1.msra.mxu0 0.0
      %920 = vmatprep.subr.mxu0 0.0
      %921 = vmatpush1.msra.mxu0 0.0
      %922 = vmatprep.subr.mxu0 0.0
      %923 = vmatpush1.msra.mxu0 0.0
      %924 = vmatprep.subr.mxu0 0.0
      %925 = vmatpush1.msra.mxu0 0.0
      %926 = vmatprep.subr.mxu0 0.0
      %927 = vmatpush1.msra.mxu0 0.0
      %928 = vmatprep.subr.mxu0 0.0
      %929 = vmatpush1.msra.mxu0 0.0
      %930 = vmatprep.subr.mxu0 0.0
      %931 = vmatpush1.msra.mxu0 0.0
      %932 = vmatprep.subr.mxu0 0.0
      %933 = vmatpush1.msra.mxu0 0.0
      %934 = vmatprep.subr.mxu0 0.0
      %935 = vmatpush1.msra.mxu0 0.0
      %936 = vmatprep.subr.mxu0 0.0
      %937 = vmatpush1.msra.mxu0 0.0
      %938 = vmatprep.subr.mxu0 0.0
      %939 = vmatpush1.msra.mxu0 0.0
      %940 = vmatprep.subr.mxu0 0.0
      %941 = vmatpush1.msra.mxu0 0.0
      %942 = vmatprep.subr.mxu0 0.0
      %943 = vmatpush1.msra.mxu0 0.0
      %944 = vmatprep.subr.mxu0 0.0
      %945 = vmatpush1.msra.mxu0 0.0
      %946 = vmatprep.subr.mxu0 0.0
      %947 = vmatpush1.msra.mxu0 0.0
      %948 = vmatprep.subr.mxu0 0.0
      %949 = vmatpush1.msra.mxu0 0.0
      %950 = vmatprep.subr.mxu0 0.0
      %951 = vmatpush1.msra.mxu0 0.0
      %952 = vmatprep.subr.mxu0 0.0
      %953 = vmatpush1.msra.mxu0 0.0
      %954 = vmatprep.subr.mxu0 0.0
      %955 = vmatpush1.msra.mxu0 0.0
      %956 = vmatprep.subr.mxu0 0.0
      %957 = vmatpush1.msra.mxu0 0.0
      %958 = vmatprep.subr.mxu0 0.0
      %959 = vmatpush1.msra.mxu0 0.0
      %960 = vmatprep.subr.mxu0 0.0
      %961 = vmatpush1.msra.mxu0 0.0
      %962 = vmatprep.subr.mxu0 0.0
      %963 = vmatpush1.msra.mxu0 0.0
      %964 = vmatprep.mubr.f32.mxu0 0.0
      %v965 = vand.u32 %v254, 4294901760
      %v966 = vsub.f32 %v254, %v965
      %v967 = vand.u32 %v966, 4294901760
      %968 = vmatmul.mubr.f32.gmra.mrb[0].mxu0 %v967
      %v969 = vpop.f32.mrb[0].mxu0
      %v970 = vadd.f32 %v788, %v969
      %v971 = vpop.f32.mrb[0].mxu0
      %972 = vmatprep.mubr.f32.mxu0 0.0
      %v973 = vand.u32 %v257, 4294901760
      %v974 = vsub.f32 %v257, %v973
      %v975 = vand.u32 %v974, 4294901760
      %976 = vmatmul.mubr.f32.gmra.mrb[0].mxu0 %v975
      %v977 = vpop.f32.mrb[0].mxu0
      %v978 = vadd.f32 %v795, %v977
      %v979 = vpop.f32.mrb[0].mxu0
      %980 = vmatprep.mubr.f32.mxu0 0.0
      %v981 = vand.u32 %v260, 4294901760
      %v982 = vsub.f32 %v260, %v981
      %v983 = vand.u32 %v982, 4294901760
      %984 = vmatmul.mubr.f32.gmra.mrb[0].mxu0 %v983
      %v985 = vpop.f32.mrb[0].mxu0
      %v986 = vadd.f32 %v802, %v985
      %v987 = vpop.f32.mrb[0].mxu0
      %988 = vmatprep.mubr.f32.mxu0 0.0
      %v989 = vand.u32 %v263, 4294901760
      %v990 = vsub.f32 %v263, %v989
      %v991 = vand.u32 %v990, 4294901760
      %992 = vmatmul.mubr.f32.gmra.mrb[0].mxu0 %v991
      %v993 = vpop.f32.mrb[0].mxu0
      %v994 = vadd.f32 %v809, %v993
      %v995 = vpop.f32.mrb[0].mxu0
      %996 = vmatprep.mubr.f32.mxu0 0.0
      %v997 = vand.u32 %v266, 4294901760
      %v998 = vsub.f32 %v266, %v997
      %v999 = vand.u32 %v998, 4294901760
      %1000 = vmatmul.mubr.f32.gmra.mrb[0].mxu0 %v999
      %v1001 = vpop.f32.mrb[0].mxu0
      %v1002 = vadd.f32 %v816, %v1001
      %v1003 = vpop.f32.mrb[0].mxu0
      %1004 = vmatprep.mubr.f32.mxu0 0.0
      %v1005 = vand.u32 %v269, 4294901760
      %v1006 = vsub.f32 %v269, %v1005
      %v1007 = vand.u32 %v1006, 4294901760
      %1008 = vmatmul.mubr.f32.gmra.mrb[0].mxu0 %v1007
      %v1009 = vpop.f32.mrb[0].mxu0
      %v1010 = vadd.f32 %v823, %v1009
      %v1011 = vpop.f32.mrb[0].mxu0
      %1012 = vmatprep.mubr.f32.mxu0 0.0
      %v1013 = vand.u32 %v272, 4294901760
      %v1014 = vsub.f32 %v272, %v1013
      %v1015 = vand.u32 %v1014, 4294901760
      %1016 = vmatmul.mubr.f32.gmra.mrb[0].mxu0 %v1015
      %v1017 = vpop.f32.mrb[0].mxu0
      %v1018 = vadd.f32 %v830, %v1017
      %v1019 = vpop.f32.mrb[0].mxu0
      %1020 = vmatprep.mubr.f32.mxu0 0.0
      %v1021 = vand.u32 %v275, 4294901760
      %v1022 = vsub.f32 %v275, %v1021
      %v1023 = vand.u32 %v1022, 4294901760
      %1024 = vmatmul.mubr.f32.gmra.mrb[0].mxu0 %v1023
      %v1025 = vpop.f32.mrb[0].mxu0
      %v1026 = vadd.f32 %v837, %v1025
      %v1027 = vpop.f32.mrb[0].mxu0
      %1028 = vmatprep.mubr.f32.mxu0 0.0
      %v1029 = vand.u32 %v278, 4294901760
      %v1030 = vsub.f32 %v278, %v1029
      %v1031 = vand.u32 %v1030, 4294901760
      %1032 = vmatmul.mubr.f32.gmra.mrb[0].mxu0 %v1031
      %v1033 = vpop.f32.mrb[0].mxu0
      %v1034 = vadd.f32 %v844, %v1033
      %v1035 = vpop.f32.mrb[0].mxu0
      %1036 = vmatprep.mubr.f32.mxu0 0.0
      %v1037 = vand.u32 %v281, 4294901760
      %v1038 = vsub.f32 %v281, %v1037
      %v1039 = vand.u32 %v1038, 4294901760
      %1040 = vmatmul.mubr.f32.gmra.mrb[0].mxu0 %v1039
      %v1041 = vpop.f32.mrb[0].mxu0
      %v1042 = vadd.f32 %v851, %v1041
      %v1043 = vpop.f32.mrb[0].mxu0
      %1044 = vmatprep.mubr.f32.mxu0 0.0
      %v1045 = vand.u32 %v284, 4294901760
      %v1046 = vsub.f32 %v284, %v1045
      %v1047 = vand.u32 %v1046, 4294901760
      %1048 = vmatmul.mubr.f32.gmra.mrb[0].mxu0 %v1047
      %v1049 = vpop.f32.mrb[0].mxu0
      %v1050 = vadd.f32 %v858, %v1049
      %v1051 = vpop.f32.mrb[0].mxu0
      %1052 = vmatprep.mubr.f32.mxu0 0.0
      %v1053 = vand.u32 %v287, 4294901760
      %v1054 = vsub.f32 %v287, %v1053
      %v1055 = vand.u32 %v1054, 4294901760
      %1056 = vmatmul.mubr.f32.gmra.mrb[0].mxu0 %v1055
      %v1057 = vpop.f32.mrb[0].mxu0
      %v1058 = vadd.f32 %v865, %v1057
      %v1059 = vpop.f32.mrb[0].mxu0
      %1060 = vmatprep.mubr.f32.mxu0 0.0
      %v1061 = vand.u32 %v290, 4294901760
      %v1062 = vsub.f32 %v290, %v1061
      %v1063 = vand.u32 %v1062, 4294901760
      %1064 = vmatmul.mubr.f32.gmra.mrb[0].mxu0 %v1063
      %v1065 = vpop.f32.mrb[0].mxu0
      %v1066 = vadd.f32 %v872, %v1065
      %v1067 = vpop.f32.mrb[0].mxu0
      %1068 = vmatprep.mubr.f32.mxu0 0.0
      %v1069 = vand.u32 %v293, 4294901760
      %v1070 = vsub.f32 %v293, %v1069
      %v1071 = vand.u32 %v1070, 4294901760
      %1072 = vmatmul.mubr.f32.gmra.mrb[0].mxu0 %v1071
      %v1073 = vpop.f32.mrb[0].mxu0
      %v1074 = vadd.f32 %v879, %v1073
      %v1075 = vpop.f32.mrb[0].mxu0
      %1076 = vmatprep.mubr.f32.mxu0 0.0
      %v1077 = vand.u32 %v296, 4294901760
      %v1078 = vsub.f32 %v296, %v1077
      %v1079 = vand.u32 %v1078, 4294901760
      %1080 = vmatmul.mubr.f32.gmra.mrb[0].mxu0 %v1079
      %v1081 = vpop.f32.mrb[0].mxu0
      %v1082 = vadd.f32 %v886, %v1081
      %v1083 = vpop.f32.mrb[0].mxu0
      %1084 = vmatprep.mubr.f32.mxu0 0.0
      %v1085 = vand.u32 %v299, 4294901760
      %v1086 = vsub.f32 %v299, %v1085
      %v1087 = vand.u32 %v1086, 4294901760
      %1088 = vmatmul.mubr.f32.gmra.mrb[0].mxu0 %v1087
      %v1089 = vpop.f32.mrb[0].mxu0
      %v1090 = vadd.f32 %v893, %v1089
      %v1091 = vpop.f32.mrb[0].mxu0
      %1092 = vdwg.mxu0
      %1093 = vmatprep.subr.mxu0 0.0
      %v1094 = vand.u32 %v241, 4294901760
      %v1095 = vsub.f32 %v241, %v1094
      %v1096 = vand.u32 %v1095, 4294901760
      %1097 = vmatpush1.msra.mxu0 %v1096
      %1098 = vmatprep.subr.mxu0 0.0
      %v1099 = vand.u32 %v242, 4294901760
      %v1100 = vsub.f32 %v242, %v1099
      %v1101 = vand.u32 %v1100, 4294901760
      %1102 = vmatpush1.msra.mxu0 %v1101
      %1103 = vmatprep.subr.mxu0 0.0
      %v1104 = vand.u32 %v243, 4294901760
      %v1105 = vsub.f32 %v243, %v1104
      %v1106 = vand.u32 %v1105, 4294901760
      %1107 = vmatpush1.msra.mxu0 %v1106
      %1108 = vmatprep.subr.mxu0 0.0
      %v1109 = vand.u32 %v244, 4294901760
      %v1110 = vsub.f32 %v244, %v1109
      %v1111 = vand.u32 %v1110, 4294901760
      %1112 = vmatpush1.msra.mxu0 %v1111
      %1113 = vmatprep.subr.mxu0 0.0
      %1114 = vmatpush1.msra.mxu0 0.0
      %1115 = vmatprep.subr.mxu0 0.0
      %1116 = vmatpush1.msra.mxu0 0.0
      %1117 = vmatprep.subr.mxu0 0.0
      %1118 = vmatpush1.msra.mxu0 0.0
      %1119 = vmatprep.subr.mxu0 0.0
      %1120 = vmatpush1.msra.mxu0 0.0
      %1121 = vmatprep.subr.mxu0 0.0
      %1122 = vmatpush1.msra.mxu0 0.0
      %1123 = vmatprep.subr.mxu0 0.0
      %1124 = vmatpush1.msra.mxu0 0.0
      %1125 = vmatprep.subr.mxu0 0.0
      %1126 = vmatpush1.msra.mxu0 0.0
      %1127 = vmatprep.subr.mxu0 0.0
      %1128 = vmatpush1.msra.mxu0 0.0
      %1129 = vmatprep.subr.mxu0 0.0
      %1130 = vmatpush1.msra.mxu0 0.0
      %1131 = vmatprep.subr.mxu0 0.0
      %1132 = vmatpush1.msra.mxu0 0.0
      %1133 = vmatprep.subr.mxu0 0.0
      %1134 = vmatpush1.msra.mxu0 0.0
      %1135 = vmatprep.subr.mxu0 0.0
      %1136 = vmatpush1.msra.mxu0 0.0
      %1137 = vmatprep.subr.mxu0 0.0
      %1138 = vmatpush1.msra.mxu0 0.0
      %1139 = vmatprep.subr.mxu0 0.0
      %1140 = vmatpush1.msra.mxu0 0.0
      %1141 = vmatprep.subr.mxu0 0.0
      %1142 = vmatpush1.msra.mxu0 0.0
      %1143 = vmatprep.subr.mxu0 0.0
      %1144 = vmatpush1.msra.mxu0 0.0
      %1145 = vmatprep.subr.mxu0 0.0
      %1146 = vmatpush1.msra.mxu0 0.0
      %1147 = vmatprep.subr.mxu0 0.0
      %1148 = vmatpush1.msra.mxu0 0.0
      %1149 = vmatprep.subr.mxu0 0.0
      %1150 = vmatpush1.msra.mxu0 0.0
      %1151 = vmatprep.subr.mxu0 0.0
      %1152 = vmatpush1.msra.mxu0 0.0
      %1153 = vmatprep.subr.mxu0 0.0
      %1154 = vmatpush1.msra.mxu0 0.0
      %1155 = vmatprep.subr.mxu0 0.0
      %1156 = vmatpush1.msra.mxu0 0.0
      %1157 = vmatprep.subr.mxu0 0.0
      %1158 = vmatpush1.msra.mxu0 0.0
      %1159 = vmatprep.subr.mxu0 0.0
      %1160 = vmatpush1.msra.mxu0 0.0
      %1161 = vmatprep.subr.mxu0 0.0
      %1162 = vmatpush1.msra.mxu0 0.0
      %1163 = vmatprep.subr.mxu0 0.0
      %1164 = vmatpush1.msra.mxu0 0.0
      %1165 = vmatprep.subr.mxu0 0.0
      %1166 = vmatpush1.msra.mxu0 0.0
      %1167 = vmatprep.subr.mxu0 0.0
      %1168 = vmatpush1.msra.mxu0 0.0
      %1169 = vmatprep.mubr.f32.mxu0 0.0
      %v1170 = vand.u32 %v254, 4294901760
      %1171 = vmatmul.mubr.f32.gmra.mrb[0].mxu0 %v1170
      %v1172 = vpop.f32.mrb[0].mxu0
      %v1173 = vadd.f32 %v970, %v1172
      %v1174 = vpop.f32.mrb[0].mxu0
      %1175 = vmatprep.mubr.f32.mxu0 0.0
      %v1176 = vand.u32 %v257, 4294901760
      %1177 = vmatmul.mubr.f32.gmra.mrb[0].mxu0 %v1176
      %v1178 = vpop.f32.mrb[0].mxu0
      %v1179 = vadd.f32 %v978, %v1178
      %v1180 = vpop.f32.mrb[0].mxu0
      %1181 = vmatprep.mubr.f32.mxu0 0.0
      %v1182 = vand.u32 %v260, 4294901760
      %1183 = vmatmul.mubr.f32.gmra.mrb[0].mxu0 %v1182
      %v1184 = vpop.f32.mrb[0].mxu0
      %v1185 = vadd.f32 %v986, %v1184
      %v1186 = vpop.f32.mrb[0].mxu0
      %1187 = vmatprep.mubr.f32.mxu0 0.0
      %v1188 = vand.u32 %v263, 4294901760
      %1189 = vmatmul.mubr.f32.gmra.mrb[0].mxu0 %v1188
      %v1190 = vpop.f32.mrb[0].mxu0
      %v1191 = vadd.f32 %v994, %v1190
      %v1192 = vpop.f32.mrb[0].mxu0
      %1193 = vmatprep.mubr.f32.mxu0 0.0
      %v1194 = vand.u32 %v266, 4294901760
      %1195 = vmatmul.mubr.f32.gmra.mrb[0].mxu0 %v1194
      %v1196 = vpop.f32.mrb[0].mxu0
      %v1197 = vadd.f32 %v1002, %v1196
      %v1198 = vpop.f32.mrb[0].mxu0
      %1199 = vmatprep.mubr.f32.mxu0 0.0
      %v1200 = vand.u32 %v269, 4294901760
      %1201 = vmatmul.mubr.f32.gmra.mrb[0].mxu0 %v1200
      %v1202 = vpop.f32.mrb[0].mxu0
      %v1203 = vadd.f32 %v1010, %v1202
      %v1204 = vpop.f32.mrb[0].mxu0
      %1205 = vmatprep.mubr.f32.mxu0 0.0
      %v1206 = vand.u32 %v272, 4294901760
      %1207 = vmatmul.mubr.f32.gmra.mrb[0].mxu0 %v1206
      %v1208 = vpop.f32.mrb[0].mxu0
      %v1209 = vadd.f32 %v1018, %v1208
      %v1210 = vpop.f32.mrb[0].mxu0
      %1211 = vmatprep.mubr.f32.mxu0 0.0
      %v1212 = vand.u32 %v275, 4294901760
      %1213 = vmatmul.mubr.f32.gmra.mrb[0].mxu0 %v1212
      %v1214 = vpop.f32.mrb[0].mxu0
      %v1215 = vadd.f32 %v1026, %v1214
      %v1216 = vpop.f32.mrb[0].mxu0
      %1217 = vmatprep.mubr.f32.mxu0 0.0
      %v1218 = vand.u32 %v278, 4294901760
      %1219 = vmatmul.mubr.f32.gmra.mrb[0].mxu0 %v1218
      %v1220 = vpop.f32.mrb[0].mxu0
      %v1221 = vadd.f32 %v1034, %v1220
      %v1222 = vpop.f32.mrb[0].mxu0
      %1223 = vmatprep.mubr.f32.mxu0 0.0
      %v1224 = vand.u32 %v281, 4294901760
      %1225 = vmatmul.mubr.f32.gmra.mrb[0].mxu0 %v1224
      %v1226 = vpop.f32.mrb[0].mxu0
      %v1227 = vadd.f32 %v1042, %v1226
      %v1228 = vpop.f32.mrb[0].mxu0
      %1229 = vmatprep.mubr.f32.mxu0 0.0
      %v1230 = vand.u32 %v284, 4294901760
      %1231 = vmatmul.mubr.f32.gmra.mrb[0].mxu0 %v1230
      %v1232 = vpop.f32.mrb[0].mxu0
      %v1233 = vadd.f32 %v1050, %v1232
      %v1234 = vpop.f32.mrb[0].mxu0
      %1235 = vmatprep.mubr.f32.mxu0 0.0
      %v1236 = vand.u32 %v287, 4294901760
      %1237 = vmatmul.mubr.f32.gmra.mrb[0].mxu0 %v1236
      %v1238 = vpop.f32.mrb[0].mxu0
      %v1239 = vadd.f32 %v1058, %v1238
      %v1240 = vpop.f32.mrb[0].mxu0
      %1241 = vmatprep.mubr.f32.mxu0 0.0
      %v1242 = vand.u32 %v290, 4294901760
      %1243 = vmatmul.mubr.f32.gmra.mrb[0].mxu0 %v1242
      %v1244 = vpop.f32.mrb[0].mxu0
      %v1245 = vadd.f32 %v1066, %v1244
      %v1246 = vpop.f32.mrb[0].mxu0
      %1247 = vmatprep.mubr.f32.mxu0 0.0
      %v1248 = vand.u32 %v293, 4294901760
      %1249 = vmatmul.mubr.f32.gmra.mrb[0].mxu0 %v1248
      %v1250 = vpop.f32.mrb[0].mxu0
      %v1251 = vadd.f32 %v1074, %v1250
      %v1252 = vpop.f32.mrb[0].mxu0
      %1253 = vmatprep.mubr.f32.mxu0 0.0
      %v1254 = vand.u32 %v296, 4294901760
      %1255 = vmatmul.mubr.f32.gmra.mrb[0].mxu0 %v1254
      %v1256 = vpop.f32.mrb[0].mxu0
      %v1257 = vadd.f32 %v1082, %v1256
      %v1258 = vpop.f32.mrb[0].mxu0
      %1259 = vmatprep.mubr.f32.mxu0 0.0
      %v1260 = vand.u32 %v299, 4294901760
      %1261 = vmatmul.mubr.f32.gmra.mrb[0].mxu0 %v1260
      %v1262 = vpop.f32.mrb[0].mxu0
      %v1263 = vadd.f32 %v1090, %v1262
      %v1264 = vpop.f32.mrb[0].mxu0
      %1265 = vdwg.mxu0
      %1266 = vmatprep.subr.mxu0 0.0
      %v1267 = vand.u32 %v241, 4294901760
      %1268 = vmatpush1.msra.mxu0 %v1267
      %1269 = vmatprep.subr.mxu0 0.0
      %v1270 = vand.u32 %v242, 4294901760
      %1271 = vmatpush1.msra.mxu0 %v1270
      %1272 = vmatprep.subr.mxu0 0.0
      %v1273 = vand.u32 %v243, 4294901760
      %1274 = vmatpush1.msra.mxu0 %v1273
      %1275 = vmatprep.subr.mxu0 0.0
      %v1276 = vand.u32 %v244, 4294901760
      %1277 = vmatpush1.msra.mxu0 %v1276
      %1278 = vmatprep.subr.mxu0 0.0
      %1279 = vmatpush1.msra.mxu0 0.0
      %1280 = vmatprep.subr.mxu0 0.0
      %1281 = vmatpush1.msra.mxu0 0.0
      %1282 = vmatprep.subr.mxu0 0.0
      %1283 = vmatpush1.msra.mxu0 0.0
      %1284 = vmatprep.subr.mxu0 0.0
      %1285 = vmatpush1.msra.mxu0 0.0
      %1286 = vmatprep.subr.mxu0 0.0
      %1287 = vmatpush1.msra.mxu0 0.0
      %1288 = vmatprep.subr.mxu0 0.0
      %1289 = vmatpush1.msra.mxu0 0.0
      %1290 = vmatprep.subr.mxu0 0.0
      %1291 = vmatpush1.msra.mxu0 0.0
      %1292 = vmatprep.subr.mxu0 0.0
      %1293 = vmatpush1.msra.mxu0 0.0
      %1294 = vmatprep.subr.mxu0 0.0
      %1295 = vmatpush1.msra.mxu0 0.0
      %1296 = vmatprep.subr.mxu0 0.0
      %1297 = vmatpush1.msra.mxu0 0.0
      %1298 = vmatprep.subr.mxu0 0.0
      %1299 = vmatpush1.msra.mxu0 0.0
      %1300 = vmatprep.subr.mxu0 0.0
      %1301 = vmatpush1.msra.mxu0 0.0
      %1302 = vmatprep.subr.mxu0 0.0
      %1303 = vmatpush1.msra.mxu0 0.0
      %1304 = vmatprep.subr.mxu0 0.0
      %1305 = vmatpush1.msra.mxu0 0.0
      %1306 = vmatprep.subr.mxu0 0.0
      %1307 = vmatpush1.msra.mxu0 0.0
      %1308 = vmatprep.subr.mxu0 0.0
      %1309 = vmatpush1.msra.mxu0 0.0
      %1310 = vmatprep.subr.mxu0 0.0
      %1311 = vmatpush1.msra.mxu0 0.0
      %1312 = vmatprep.subr.mxu0 0.0
      %1313 = vmatpush1.msra.mxu0 0.0
      %1314 = vmatprep.subr.mxu0 0.0
      %1315 = vmatpush1.msra.mxu0 0.0
      %1316 = vmatprep.subr.mxu0 0.0
      %1317 = vmatpush1.msra.mxu0 0.0
      %1318 = vmatprep.subr.mxu0 0.0
      %1319 = vmatpush1.msra.mxu0 0.0
      %1320 = vmatprep.subr.mxu0 0.0
      %1321 = vmatpush1.msra.mxu0 0.0
      %1322 = vmatprep.subr.mxu0 0.0
      %1323 = vmatpush1.msra.mxu0 0.0
      %1324 = vmatprep.subr.mxu0 0.0
      %1325 = vmatpush1.msra.mxu0 0.0
      %1326 = vmatprep.subr.mxu0 0.0
      %1327 = vmatpush1.msra.mxu0 0.0
      %1328 = vmatprep.subr.mxu0 0.0
      %1329 = vmatpush1.msra.mxu0 0.0
      %1330 = vmatprep.subr.mxu0 0.0
      %1331 = vmatpush1.msra.mxu0 0.0
      %1332 = vmatprep.subr.mxu0 0.0
      %1333 = vmatpush1.msra.mxu0 0.0
      %1334 = vmatprep.mubr.f32.mxu0 0.0
      %v1335 = vand.u32 %v254, 4294901760
      %1336 = vmatmul.mubr.f32.gmra.mrb[0].mxu0 %v1335
      %v1337 = vpop.f32.mrb[0].mxu0
      %v1338 = vadd.f32 %v1173, %v1337
      %v1339 = vpop.f32.mrb[0].mxu0
      %1340 = vmatprep.mubr.f32.mxu0 0.0
      %v1341 = vand.u32 %v257, 4294901760
      %1342 = vmatmul.mubr.f32.gmra.mrb[0].mxu0 %v1341
      %v1343 = vpop.f32.mrb[0].mxu0
      %v1344 = vadd.f32 %v1179, %v1343
      %v1345 = vpop.f32.mrb[0].mxu0
      %1346 = vmatprep.mubr.f32.mxu0 0.0
      %v1347 = vand.u32 %v260, 4294901760
      %1348 = vmatmul.mubr.f32.gmra.mrb[0].mxu0 %v1347
      %v1349 = vpop.f32.mrb[0].mxu0
      %v1350 = vadd.f32 %v1185, %v1349
      %v1351 = vpop.f32.mrb[0].mxu0
      %1352 = vmatprep.mubr.f32.mxu0 0.0
      %v1353 = vand.u32 %v263, 4294901760
      %1354 = vmatmul.mubr.f32.gmra.mrb[0].mxu0 %v1353
      %v1355 = vpop.f32.mrb[0].mxu0
      %v1356 = vadd.f32 %v1191, %v1355
      %v1357 = vpop.f32.mrb[0].mxu0
      %1358 = vmatprep.mubr.f32.mxu0 0.0
      %v1359 = vand.u32 %v266, 4294901760
      %1360 = vmatmul.mubr.f32.gmra.mrb[0].mxu0 %v1359
      %v1361 = vpop.f32.mrb[0].mxu0
      %v1362 = vadd.f32 %v1197, %v1361
      %v1363 = vpop.f32.mrb[0].mxu0
      %1364 = vmatprep.mubr.f32.mxu0 0.0
      %v1365 = vand.u32 %v269, 4294901760
      %1366 = vmatmul.mubr.f32.gmra.mrb[0].mxu0 %v1365
      %v1367 = vpop.f32.mrb[0].mxu0
      %v1368 = vadd.f32 %v1203, %v1367
      %v1369 = vpop.f32.mrb[0].mxu0
      %1370 = vmatprep.mubr.f32.mxu0 0.0
      %v1371 = vand.u32 %v272, 4294901760
      %1372 = vmatmul.mubr.f32.gmra.mrb[0].mxu0 %v1371
      %v1373 = vpop.f32.mrb[0].mxu0
      %v1374 = vadd.f32 %v1209, %v1373
      %v1375 = vpop.f32.mrb[0].mxu0
      %1376 = vmatprep.mubr.f32.mxu0 0.0
      %v1377 = vand.u32 %v275, 4294901760
      %1378 = vmatmul.mubr.f32.gmra.mrb[0].mxu0 %v1377
      %v1379 = vpop.f32.mrb[0].mxu0
      %v1380 = vadd.f32 %v1215, %v1379
      %v1381 = vpop.f32.mrb[0].mxu0
      %1382 = vmatprep.mubr.f32.mxu0 0.0
      %v1383 = vand.u32 %v278, 4294901760
      %1384 = vmatmul.mubr.f32.gmra.mrb[0].mxu0 %v1383
      %v1385 = vpop.f32.mrb[0].mxu0
      %v1386 = vadd.f32 %v1221, %v1385
      %v1387 = vpop.f32.mrb[0].mxu0
      %1388 = vmatprep.mubr.f32.mxu0 0.0
      %v1389 = vand.u32 %v281, 4294901760
      %1390 = vmatmul.mubr.f32.gmra.mrb[0].mxu0 %v1389
      %v1391 = vpop.f32.mrb[0].mxu0
      %v1392 = vadd.f32 %v1227, %v1391
      %v1393 = vpop.f32.mrb[0].mxu0
      %1394 = vmatprep.mubr.f32.mxu0 0.0
      %v1395 = vand.u32 %v284, 4294901760
      %1396 = vmatmul.mubr.f32.gmra.mrb[0].mxu0 %v1395
      %v1397 = vpop.f32.mrb[0].mxu0
      %v1398 = vadd.f32 %v1233, %v1397
      %v1399 = vpop.f32.mrb[0].mxu0
      %1400 = vmatprep.mubr.f32.mxu0 0.0
      %v1401 = vand.u32 %v287, 4294901760
      %1402 = vmatmul.mubr.f32.gmra.mrb[0].mxu0 %v1401
      %v1403 = vpop.f32.mrb[0].mxu0
      %v1404 = vadd.f32 %v1239, %v1403
      %v1405 = vpop.f32.mrb[0].mxu0
      %1406 = vmatprep.mubr.f32.mxu0 0.0
      %v1407 = vand.u32 %v290, 4294901760
      %1408 = vmatmul.mubr.f32.gmra.mrb[0].mxu0 %v1407
      %v1409 = vpop.f32.mrb[0].mxu0
      %v1410 = vadd.f32 %v1245, %v1409
      %v1411 = vpop.f32.mrb[0].mxu0
      %1412 = vmatprep.mubr.f32.mxu0 0.0
      %v1413 = vand.u32 %v293, 4294901760
      %1414 = vmatmul.mubr.f32.gmra.mrb[0].mxu0 %v1413
      %v1415 = vpop.f32.mrb[0].mxu0
      %v1416 = vadd.f32 %v1251, %v1415
      %v1417 = vpop.f32.mrb[0].mxu0
      %1418 = vmatprep.mubr.f32.mxu0 0.0
      %v1419 = vand.u32 %v296, 4294901760
      %1420 = vmatmul.mubr.f32.gmra.mrb[0].mxu0 %v1419
      %v1421 = vpop.f32.mrb[0].mxu0
      %v1422 = vadd.f32 %v1257, %v1421
      %v1423 = vpop.f32.mrb[0].mxu0
      %1424 = vmatprep.mubr.f32.mxu0 0.0
      %v1425 = vand.u32 %v299, 4294901760
      %1426 = vmatmul.mubr.f32.gmra.mrb[0].mxu0 %v1425
      %v1427 = vpop.f32.mrb[0].mxu0
      %v1428 = vadd.f32 %v1263, %v1427
      %v1429 = vpop.f32.mrb[0].mxu0
      %1430 = vdwg.mxu0
      %v1431 = vmax.f32 %v1338, 0.0
      %v1432 = vmax.f32 %v1344, 0.0
      %v1433 = vmax.f32 %v1350, 0.0
      %v1434 = vmax.f32 %v1356, 0.0
      %v1435 = vmax.f32 %v1362, 0.0
      %v1436 = vmax.f32 %v1368, 0.0
      %v1437 = vmax.f32 %v1374, 0.0
      %v1438 = vmax.f32 %v1380, 0.0
      %v1439 = vmax.f32 %v1386, 0.0
      %v1440 = vmax.f32 %v1392, 0.0
      %v1441 = vmax.f32 %v1398, 0.0
      %v1442 = vmax.f32 %v1404, 0.0
      %v1443 = vmax.f32 %v1410, 0.0
      %v1444 = vmax.f32 %v1416, 0.0
      %v1445 = vmax.f32 %v1422, 0.0
      %v1446 = vmax.f32 %v1428, 0.0
      %vm1447 = vcmask 523264
      %1448 = vst.msk [vmem:[%s223] sm:$0xff] %vm1447, %v1431
      %1449 = vst.msk [vmem:[%s223 + $0x8] sm:$0xff] %vm1447, %v1432
      %1450 = vst.msk [vmem:[%s223 + $0x10] sm:$0xff] %vm1447, %v1433
      %1451 = vst.msk [vmem:[%s223 + $0x18] sm:$0xff] %vm1447, %v1434
      %1452 = vst.msk [vmem:[%s223 + $0x20] sm:$0xff] %vm1447, %v1435
      %1453 = vst.msk [vmem:[%s223 + $0x28] sm:$0xff] %vm1447, %v1436
      %1454 = vst.msk [vmem:[%s223 + $0x30] sm:$0xff] %vm1447, %v1437
      %1455 = vst.msk [vmem:[%s223 + $0x38] sm:$0xff] %vm1447, %v1438
      %1456 = vst.msk [vmem:[%s223 + $0x40] sm:$0xff] %vm1447, %v1439
      %1457 = vst.msk [vmem:[%s223 + $0x48] sm:$0xff] %vm1447, %v1440
      %1458 = vst.msk [vmem:[%s223 + $0x50] sm:$0xff] %vm1447, %v1441
      %1459 = vst.msk [vmem:[%s223 + $0x58] sm:$0xff] %vm1447, %v1442
      %1460 = vst.msk [vmem:[%s223 + $0x60] sm:$0xff] %vm1447, %v1443
      %1461 = vst.msk [vmem:[%s223 + $0x68] sm:$0xff] %vm1447, %v1444
      %1462 = vst.msk [vmem:[%s223 + $0x70] sm:$0xff] %vm1447, %v1445
      %1463 = vst.msk [vmem:[%s223 + $0x78] sm:$0xff] %vm1447, %v1446
      %s1464 = smul.u32 16, %s18
      %p1465 = scmp.lt.s32.totalorder %s1464, 63
      %s1466 = scalar_select %p1465, %s1464, 63
      %p1467 = scmp.lt.s32.totalorder %s19, 0
      %s1468 = scalar_select %p1467, %s19, 0
      %s1469 = sadd.s32 %s1468, %s1466
      %s1470 = smul.addr %s1469, 8
      %s1471 = scalar_lea.vmem %s3, %s1470
      // Predicated region
      $region33: #{tpu_custom_call.1} parent=31 // pred_check
        %p1472 = pneg %p124
      $region34: #{tpu_custom_call.1} parent=31 // pred_check_branch
        %1474 = sbr.rel (%p1472) target = $region36
      $region35: #{tpu_custom_call.1} parent=31 // pred_region
        %s1475 = smul.u32 16, %s18
      $region36: #{tpu_custom_call.1} parent=31 // pred_fallthru
        _
    $region32: #{tpu_custom_call.1} parent=5 // pred_fallthru
      _
    %p1476 = scmp.le.s32.totalorder 2, %s9
    // Predicated region
    $region37: #{tpu_custom_call.1} parent=5 // pred_check
      %p1477 = pneg %p1476
    $region38: #{tpu_custom_call.1} parent=5 // pred_check_branch
      %1479 = sbr.rel (%p1477) target = $region40
    $region39: #{tpu_custom_call.1} parent=5 // pred_region
      %s1480 = ssub.s32 %s9, 2
      // Predicated region
      $region41: #{tpu_custom_call.1} parent=39 // pred_check
        %p1481 = pneg %p130
      $region42: #{tpu_custom_call.1} parent=39 // pred_check_branch
        %1483 = sbr.rel (%p1481) target = $region44
      $region43: #{tpu_custom_call.1} parent=39 // pred_region
        %s1484 = smul.u32 16, %s20
        %p1485 = scmp.lt.s32.totalorder %s1484, 63
        %s1486 = scalar_select %p1485, %s1484, 63
        %p1487 = scmp.lt.s32.totalorder %s21, 0
        %s1488 = scalar_select %p1487, %s21, 0
        %s1489 = sadd.s32 %s1488, %s1486
        %s1490 = smul.addr %s1489, 8
        %s1491 = scalar_lea.vmem %s3, %s1490
      $region44: #{tpu_custom_call.1} parent=39 // pred_fallthru
        _
    $region40: #{tpu_custom_call.1} parent=5 // pred_fallthru
      _
  $region6: #{tpu_custom_call.1} parent=0 // loop_footer
    %s13 = sadd.s32 1, %s9
  $region7: #{tpu_custom_call.1} parent=0 // loop_footer_branch
    %8 = sbr.rel target = $region3
  $region8: #{tpu_custom_call.1} parent=0 // loop_exit
    _

</llo_original>
